<compile_context>
chip_gen: v7x
topology: tpu7x:2x2x1
jax: 0.10.0
libtpu: 0.0.40
codegen_flags: <defaults>
</compile_context>

<pallas_src>
import jax
import jax.numpy as jnp
from jax.experimental import pallas as pl
from jax.experimental.pallas import tpu as pltpu

# SELU constants (match PyTorch F.selu)
_SELU_ALPHA = 1.6732632423543772
_SELU_SCALE = 1.0507009873554805

KH = KW = 3
CIN = 4
COUT = 2


def conv_selu_sigmoid_kernel(x_ref, w_ref, b_ref, o_ref, xpad_ref):
    """One batch element: Conv2d(CIN->COUT, 3x3, pad=1) + SELU + sigmoid.

    x_ref   : (1, CIN, H, W)      VMEM, unpadded NCHW input block
    w_ref   : (COUT*CIN*KH*KW,)   SMEM f32, flattened in (co, ci, kh, kw) order
    b_ref   : (COUT,)             SMEM f32
    o_ref   : (1, COUT, H, W)     VMEM, NCHW output block (W on lane axis)
    xpad_ref: (CIN, H+2, W+2)     VMEM scratch: halo-padded input planes
    """
    _, cout, h, w = o_ref.shape

    # In-kernel halo: zero the scratch, then copy the block into its interior.
    # Re-zeroed every grid step so correctness does not depend on how the
    # "parallel" batch axis is sharded across TensorCores.
    xpad_ref[...] = jnp.zeros_like(xpad_ref)
    xpad_ref[:, 1:h + 1, 1:w + 1] = x_ref[0]

    # Per-output-channel accumulators, spatial-on-lanes layout.
    acc = [jnp.zeros((h, w), dtype=jnp.float32) for _ in range(cout)]

    # Unrolled 3x3 conv as scalar-broadcast VPU FMAs (no MXU for K=4, N=2).
    # Each shifted window is a ref-level static slice (address offset only)
    # and is loaded once, then reused for both output channels.
    for ci in range(CIN):
        for kh in range(KH):
            for kw in range(KW):
                patch = xpad_ref[ci, kh:kh + h, kw:kw + w]      # (H, W)
                for co in range(cout):
                    wv = w_ref[((co * CIN + ci) * KH + kh) * KW + kw]
                    acc[co] = acc[co] + wv * patch              # scalar * tile

    for co in range(cout):
        y = acc[co] + b_ref[co]                                 # scalar bias
        # SELU; exp argument clamped to <= 0 so large positive y never gives inf.
        # (exp(t) - 1 kept instead of expm1: ~1e-7 delta, guaranteed EUP lowering.)
        neg = _SELU_ALPHA * (jnp.exp(jnp.minimum(y, 0.0)) - 1.0)
        selu = _SELU_SCALE * jnp.where(y > 0.0, y, neg)
        # Exact sigmoid (exp runs on the EUP slot).
        o_ref[0, co, :, :] = (1.0 / (1.0 + jnp.exp(-selu))).astype(o_ref.dtype)


@jax.jit
def conv_selu_sigmoid(x_nchw, w_oihw, bias):
    """x_nchw: (N, CIN, H, W) f32 -> (N, COUT, H, W) f32 (NCHW, like PyTorch)."""
    n, cin, h, w = x_nchw.shape
    assert cin == CIN

    w_flat = w_oihw.astype(jnp.float32).reshape(-1)             # (COUT*CIN*KH*KW,)
    b_vec = bias.astype(jnp.float32)                            # (COUT,)

    taps = CIN * KH * KW
    cost = pl.CostEstimate(
        flops=2 * n * COUT * h * w * taps,
        transcendentals=2 * n * COUT * h * w,                   # selu exp + sigmoid exp
        bytes_accessed=4 * (n * CIN * h * w + n * COUT * h * w
                            + w_flat.size + b_vec.size),
    )

    return pl.pallas_call(
        conv_selu_sigmoid_kernel,
        out_shape=jax.ShapeDtypeStruct((n, COUT, h, w), jnp.float32),
        grid=(n,),
        in_specs=[
            pl.BlockSpec((1, CIN, h, w), lambda i: (i, 0, 0, 0)),
            pl.BlockSpec(memory_space=pltpu.MemorySpace.SMEM),   # weights
            pl.BlockSpec(memory_space=pltpu.MemorySpace.SMEM),   # bias
        ],
        out_specs=pl.BlockSpec((1, COUT, h, w), lambda i: (i, 0, 0, 0)),
        scratch_shapes=[pltpu.VMEM((CIN, h + 2, w + 2), jnp.float32)],
        compiler_params=pltpu.CompilerParams(
            dimension_semantics=("parallel",)),
        cost_estimate=cost,
    )(x_nchw, w_flat, b_vec)


def _reference(x_nchw, w_oihw, bias):
    y = jax.lax.conv_general_dilated(
        x_nchw, w_oihw, window_strides=(1, 1), padding=((1, 1), (1, 1)),
        dimension_numbers=('NCHW', 'OIHW', 'NCHW'))
    y = y + bias.reshape(1, COUT, 1, 1)
    y = _SELU_SCALE * jnp.where(y > 0.0, y, _SELU_ALPHA * jnp.expm1(y))
    return jax.nn.sigmoid(y)


if __name__ == "__main__":
    key = jax.random.PRNGKey(0)
    kx, kw, kb = jax.random.split(key, 3)

    N, H, W = 2, 32, 32
    x = jax.random.normal(kx, (N, CIN, H, W), dtype=jnp.float32)
    # Deterministic Conv2d-style init: uniform(-bound, bound), bound = 1/sqrt(fan_in)
    fan_in = CIN * KH * KW
    bound = 1.0 / (fan_in ** 0.5)
    w = jax.random.uniform(kw, (COUT, CIN, KH, KW),
                           minval=-bound, maxval=bound, dtype=jnp.float32)
    b = jax.random.uniform(kb, (COUT,),
                           minval=-bound, maxval=bound, dtype=jnp.float32)

    out = jax.block_until_ready(conv_selu_sigmoid(x, w, b))
    ref = jax.block_until_ready(_reference(x, w, b))

    assert out.shape == (N, COUT, H, W)
    assert jnp.allclose(out, ref, atol=1e-5, rtol=1e-5), \
        float(jnp.max(jnp.abs(out - ref)))

    print("KERNEL_OK")
</pallas_src>

<mosaic_0001>
module attributes {stable_mosaic.version = 11 : i64} {
  func.func @conv_selu_sigmoid_kernel(%arg0: i32, %arg1: memref<1x4x32x32xf32, #tpu.memory_space<vmem>>, %arg2: memref<72xf32, #tpu.memory_space<smem>>, %arg3: memref<2xf32, #tpu.memory_space<smem>>, %arg4: memref<1x2x32x32xf32, #tpu.memory_space<vmem>>, %arg5: memref<4x34x34xf32, #tpu.memory_space<vmem>>) attributes {dimension_semantics = [#tpu.dimension_semantics<parallel>], iteration_bounds = array<i64: 2>, scalar_prefetch = 0 : i64, scratch_operands = 1 : i64, tpu.core_type = #tpu.core_type<tc>, window_params = [{transform_indices = @transform_0, window_bounds = array<i64: 1, 4, 32, 32>}, {transform_indices = @transform_1, window_bounds = array<i64: 72>}, {transform_indices = @transform_2, window_bounds = array<i64: 2>}, {transform_indices = @transform_3, window_bounds = array<i64: 1, 2, 32, 32>}]} {
    %cst = arith.constant 0.000000e+00 : f32
    %0 = vector.broadcast %cst : f32 to vector<4x34x34xf32>
    %c0 = arith.constant 0 : index
    %c0_0 = arith.constant 0 : index
    %c0_1 = arith.constant 0 : index
    %1 = vector.load %arg5[%c0, %c0_0, %c0_1] : memref<4x34x34xf32, #tpu.memory_space<vmem>>, vector<4x34x34xf32>
    tpu.vector_store %arg5[%c0, %c0_0, %c0_1], %0 {strides = array<i32>} : memref<4x34x34xf32, #tpu.memory_space<vmem>>, vector<4x34x34xf32>,
    %c0_2 = arith.constant 0 : index
    %c0_3 = arith.constant 0 : index
    %c0_4 = arith.constant 0 : index
    %c0_5 = arith.constant 0 : index
    %2 = vector.load %arg1[%c0_2, %c0_3, %c0_4, %c0_5] : memref<1x4x32x32xf32, #tpu.memory_space<vmem>>, vector<1x4x32x32xf32>
    %3 = vector.shape_cast %2 : vector<1x4x32x32xf32> to vector<4x32x32xf32>
    %c0_6 = arith.constant 0 : index
    %c1 = arith.constant 1 : index
    %c1_7 = arith.constant 1 : index
    %4 = vector.load %arg5[%c0_6, %c1, %c1_7] : memref<4x34x34xf32, #tpu.memory_space<vmem>>, vector<4x32x32xf32>
    tpu.vector_store %arg5[%c0_6, %c1, %c1_7], %3 {strides = array<i32>} : memref<4x34x34xf32, #tpu.memory_space<vmem>>, vector<4x32x32xf32>,
    %cst_8 = arith.constant 0.000000e+00 : f32
    %5 = vector.broadcast %cst_8 : f32 to vector<32x32xf32>
    %cst_9 = arith.constant 0.000000e+00 : f32
    %6 = vector.broadcast %cst_9 : f32 to vector<32x32xf32>
    %c0_10 = arith.constant 0 : index
    %c0_11 = arith.constant 0 : index
    %c0_12 = arith.constant 0 : index
    %7 = vector.load %arg5[%c0_10, %c0_11, %c0_12] : memref<4x34x34xf32, #tpu.memory_space<vmem>>, vector<1x32x32xf32>
    %8 = vector.shape_cast %7 : vector<1x32x32xf32> to vector<32x32xf32>
    %c0_13 = arith.constant 0 : index
    %9 = memref.load %arg2[%c0_13] : memref<72xf32, #tpu.memory_space<smem>>
    %10 = vector.broadcast %9 : f32 to vector<32x32xf32>
    %11 = arith.mulf %10, %8 : vector<32x32xf32>
    %12 = arith.addf %5, %11 : vector<32x32xf32>
    %c36 = arith.constant 36 : index
    %13 = memref.load %arg2[%c36] : memref<72xf32, #tpu.memory_space<smem>>
    %14 = vector.broadcast %13 : f32 to vector<32x32xf32>
    %15 = arith.mulf %14, %8 : vector<32x32xf32>
    %16 = arith.addf %6, %15 : vector<32x32xf32>
    %c0_14 = arith.constant 0 : index
    %c0_15 = arith.constant 0 : index
    %c1_16 = arith.constant 1 : index
    %17 = vector.load %arg5[%c0_14, %c0_15, %c1_16] : memref<4x34x34xf32, #tpu.memory_space<vmem>>, vector<1x32x32xf32>
    %18 = vector.shape_cast %17 : vector<1x32x32xf32> to vector<32x32xf32>
    %c1_17 = arith.constant 1 : index
    %19 = memref.load %arg2[%c1_17] : memref<72xf32, #tpu.memory_space<smem>>
    %20 = vector.broadcast %19 : f32 to vector<32x32xf32>
    %21 = arith.mulf %20, %18 : vector<32x32xf32>
    %22 = arith.addf %12, %21 : vector<32x32xf32>
    %c37 = arith.constant 37 : index
    %23 = memref.load %arg2[%c37] : memref<72xf32, #tpu.memory_space<smem>>
    %24 = vector.broadcast %23 : f32 to vector<32x32xf32>
    %25 = arith.mulf %24, %18 : vector<32x32xf32>
    %26 = arith.addf %16, %25 : vector<32x32xf32>
    %c0_18 = arith.constant 0 : index
    %c0_19 = arith.constant 0 : index
    %c2 = arith.constant 2 : index
    %27 = vector.load %arg5[%c0_18, %c0_19, %c2] : memref<4x34x34xf32, #tpu.memory_space<vmem>>, vector<1x32x32xf32>
    %28 = vector.shape_cast %27 : vector<1x32x32xf32> to vector<32x32xf32>
    %c2_20 = arith.constant 2 : index
    %29 = memref.load %arg2[%c2_20] : memref<72xf32, #tpu.memory_space<smem>>
    %30 = vector.broadcast %29 : f32 to vector<32x32xf32>
    %31 = arith.mulf %30, %28 : vector<32x32xf32>
    %32 = arith.addf %22, %31 : vector<32x32xf32>
    %c38 = arith.constant 38 : index
    %33 = memref.load %arg2[%c38] : memref<72xf32, #tpu.memory_space<smem>>
    %34 = vector.broadcast %33 : f32 to vector<32x32xf32>
    %35 = arith.mulf %34, %28 : vector<32x32xf32>
    %36 = arith.addf %26, %35 : vector<32x32xf32>
    %c0_21 = arith.constant 0 : index
    %c1_22 = arith.constant 1 : index
    %c0_23 = arith.constant 0 : index
    %37 = vector.load %arg5[%c0_21, %c1_22, %c0_23] : memref<4x34x34xf32, #tpu.memory_space<vmem>>, vector<1x32x32xf32>
    %38 = vector.shape_cast %37 : vector<1x32x32xf32> to vector<32x32xf32>
    %c3 = arith.constant 3 : index
    %39 = memref.load %arg2[%c3] : memref<72xf32, #tpu.memory_space<smem>>
    %40 = vector.broadcast %39 : f32 to vector<32x32xf32>
    %41 = arith.mulf %40, %38 : vector<32x32xf32>
    %42 = arith.addf %32, %41 : vector<32x32xf32>
    %c39 = arith.constant 39 : index
    %43 = memref.load %arg2[%c39] : memref<72xf32, #tpu.memory_space<smem>>
    %44 = vector.broadcast %43 : f32 to vector<32x32xf32>
    %45 = arith.mulf %44, %38 : vector<32x32xf32>
    %46 = arith.addf %36, %45 : vector<32x32xf32>
    %c0_24 = arith.constant 0 : index
    %c1_25 = arith.constant 1 : index
    %c1_26 = arith.constant 1 : index
    %47 = vector.load %arg5[%c0_24, %c1_25, %c1_26] : memref<4x34x34xf32, #tpu.memory_space<vmem>>, vector<1x32x32xf32>
    %48 = vector.shape_cast %47 : vector<1x32x32xf32> to vector<32x32xf32>
    %c4 = arith.constant 4 : index
    %49 = memref.load %arg2[%c4] : memref<72xf32, #tpu.memory_space<smem>>
    %50 = vector.broadcast %49 : f32 to vector<32x32xf32>
    %51 = arith.mulf %50, %48 : vector<32x32xf32>
    %52 = arith.addf %42, %51 : vector<32x32xf32>
    %c40 = arith.constant 40 : index
    %53 = memref.load %arg2[%c40] : memref<72xf32, #tpu.memory_space<smem>>
    %54 = vector.broadcast %53 : f32 to vector<32x32xf32>
    %55 = arith.mulf %54, %48 : vector<32x32xf32>
    %56 = arith.addf %46, %55 : vector<32x32xf32>
    %c0_27 = arith.constant 0 : index
    %c1_28 = arith.constant 1 : index
    %c2_29 = arith.constant 2 : index
    %57 = vector.load %arg5[%c0_27, %c1_28, %c2_29] : memref<4x34x34xf32, #tpu.memory_space<vmem>>, vector<1x32x32xf32>
    %58 = vector.shape_cast %57 : vector<1x32x32xf32> to vector<32x32xf32>
    %c5 = arith.constant 5 : index
    %59 = memref.load %arg2[%c5] : memref<72xf32, #tpu.memory_space<smem>>
    %60 = vector.broadcast %59 : f32 to vector<32x32xf32>
    %61 = arith.mulf %60, %58 : vector<32x32xf32>
    %62 = arith.addf %52, %61 : vector<32x32xf32>
    %c41 = arith.constant 41 : index
    %63 = memref.load %arg2[%c41] : memref<72xf32, #tpu.memory_space<smem>>
    %64 = vector.broadcast %63 : f32 to vector<32x32xf32>
    %65 = arith.mulf %64, %58 : vector<32x32xf32>
    %66 = arith.addf %56, %65 : vector<32x32xf32>
    %c0_30 = arith.constant 0 : index
    %c2_31 = arith.constant 2 : index
    %c0_32 = arith.constant 0 : index
    %67 = vector.load %arg5[%c0_30, %c2_31, %c0_32] : memref<4x34x34xf32, #tpu.memory_space<vmem>>, vector<1x32x32xf32>
    %68 = vector.shape_cast %67 : vector<1x32x32xf32> to vector<32x32xf32>
    %c6 = arith.constant 6 : index
    %69 = memref.load %arg2[%c6] : memref<72xf32, #tpu.memory_space<smem>>
    %70 = vector.broadcast %69 : f32 to vector<32x32xf32>
    %71 = arith.mulf %70, %68 : vector<32x32xf32>
    %72 = arith.addf %62, %71 : vector<32x32xf32>
    %c42 = arith.constant 42 : index
    %73 = memref.load %arg2[%c42] : memref<72xf32, #tpu.memory_space<smem>>
    %74 = vector.broadcast %73 : f32 to vector<32x32xf32>
    %75 = arith.mulf %74, %68 : vector<32x32xf32>
    %76 = arith.addf %66, %75 : vector<32x32xf32>
    %c0_33 = arith.constant 0 : index
    %c2_34 = arith.constant 2 : index
    %c1_35 = arith.constant 1 : index
    %77 = vector.load %arg5[%c0_33, %c2_34, %c1_35] : memref<4x34x34xf32, #tpu.memory_space<vmem>>, vector<1x32x32xf32>
    %78 = vector.shape_cast %77 : vector<1x32x32xf32> to vector<32x32xf32>
    %c7 = arith.constant 7 : index
    %79 = memref.load %arg2[%c7] : memref<72xf32, #tpu.memory_space<smem>>
    %80 = vector.broadcast %79 : f32 to vector<32x32xf32>
    %81 = arith.mulf %80, %78 : vector<32x32xf32>
    %82 = arith.addf %72, %81 : vector<32x32xf32>
    %c43 = arith.constant 43 : index
    %83 = memref.load %arg2[%c43] : memref<72xf32, #tpu.memory_space<smem>>
    %84 = vector.broadcast %83 : f32 to vector<32x32xf32>
    %85 = arith.mulf %84, %78 : vector<32x32xf32>
    %86 = arith.addf %76, %85 : vector<32x32xf32>
    %c0_36 = arith.constant 0 : index
    %c2_37 = arith.constant 2 : index
    %c2_38 = arith.constant 2 : index
    %87 = vector.load %arg5[%c0_36, %c2_37, %c2_38] : memref<4x34x34xf32, #tpu.memory_space<vmem>>, vector<1x32x32xf32>
    %88 = vector.shape_cast %87 : vector<1x32x32xf32> to vector<32x32xf32>
    %c8 = arith.constant 8 : index
    %89 = memref.load %arg2[%c8] : memref<72xf32, #tpu.memory_space<smem>>
    %90 = vector.broadcast %89 : f32 to vector<32x32xf32>
    %91 = arith.mulf %90, %88 : vector<32x32xf32>
    %92 = arith.addf %82, %91 : vector<32x32xf32>
    %c44 = arith.constant 44 : index
    %93 = memref.load %arg2[%c44] : memref<72xf32, #tpu.memory_space<smem>>
    %94 = vector.broadcast %93 : f32 to vector<32x32xf32>
    %95 = arith.mulf %94, %88 : vector<32x32xf32>
    %96 = arith.addf %86, %95 : vector<32x32xf32>
    %c1_39 = arith.constant 1 : index
    %c0_40 = arith.constant 0 : index
    %c0_41 = arith.constant 0 : index
    %97 = vector.load %arg5[%c1_39, %c0_40, %c0_41] : memref<4x34x34xf32, #tpu.memory_space<vmem>>, vector<1x32x32xf32>
    %98 = vector.shape_cast %97 : vector<1x32x32xf32> to vector<32x32xf32>
    %c9 = arith.constant 9 : index
    %99 = memref.load %arg2[%c9] : memref<72xf32, #tpu.memory_space<smem>>
    %100 = vector.broadcast %99 : f32 to vector<32x32xf32>
    %101 = arith.mulf %100, %98 : vector<32x32xf32>
    %102 = arith.addf %92, %101 : vector<32x32xf32>
    %c45 = arith.constant 45 : index
    %103 = memref.load %arg2[%c45] : memref<72xf32, #tpu.memory_space<smem>>
    %104 = vector.broadcast %103 : f32 to vector<32x32xf32>
    %105 = arith.mulf %104, %98 : vector<32x32xf32>
    %106 = arith.addf %96, %105 : vector<32x32xf32>
    %c1_42 = arith.constant 1 : index
    %c0_43 = arith.constant 0 : index
    %c1_44 = arith.constant 1 : index
    %107 = vector.load %arg5[%c1_42, %c0_43, %c1_44] : memref<4x34x34xf32, #tpu.memory_space<vmem>>, vector<1x32x32xf32>
    %108 = vector.shape_cast %107 : vector<1x32x32xf32> to vector<32x32xf32>
    %c10 = arith.constant 10 : index
    %109 = memref.load %arg2[%c10] : memref<72xf32, #tpu.memory_space<smem>>
    %110 = vector.broadcast %109 : f32 to vector<32x32xf32>
    %111 = arith.mulf %110, %108 : vector<32x32xf32>
    %112 = arith.addf %102, %111 : vector<32x32xf32>
    %c46 = arith.constant 46 : index
    %113 = memref.load %arg2[%c46] : memref<72xf32, #tpu.memory_space<smem>>
    %114 = vector.broadcast %113 : f32 to vector<32x32xf32>
    %115 = arith.mulf %114, %108 : vector<32x32xf32>
    %116 = arith.addf %106, %115 : vector<32x32xf32>
    %c1_45 = arith.constant 1 : index
    %c0_46 = arith.constant 0 : index
    %c2_47 = arith.constant 2 : index
    %117 = vector.load %arg5[%c1_45, %c0_46, %c2_47] : memref<4x34x34xf32, #tpu.memory_space<vmem>>, vector<1x32x32xf32>
    %118 = vector.shape_cast %117 : vector<1x32x32xf32> to vector<32x32xf32>
    %c11 = arith.constant 11 : index
    %119 = memref.load %arg2[%c11] : memref<72xf32, #tpu.memory_space<smem>>
    %120 = vector.broadcast %119 : f32 to vector<32x32xf32>
    %121 = arith.mulf %120, %118 : vector<32x32xf32>
    %122 = arith.addf %112, %121 : vector<32x32xf32>
    %c47 = arith.constant 47 : index
    %123 = memref.load %arg2[%c47] : memref<72xf32, #tpu.memory_space<smem>>
    %124 = vector.broadcast %123 : f32 to vector<32x32xf32>
    %125 = arith.mulf %124, %118 : vector<32x32xf32>
    %126 = arith.addf %116, %125 : vector<32x32xf32>
    %c1_48 = arith.constant 1 : index
    %c1_49 = arith.constant 1 : index
    %c0_50 = arith.constant 0 : index
    %127 = vector.load %arg5[%c1_48, %c1_49, %c0_50] : memref<4x34x34xf32, #tpu.memory_space<vmem>>, vector<1x32x32xf32>
    %128 = vector.shape_cast %127 : vector<1x32x32xf32> to vector<32x32xf32>
    %c12 = arith.constant 12 : index
    %129 = memref.load %arg2[%c12] : memref<72xf32, #tpu.memory_space<smem>>
    %130 = vector.broadcast %129 : f32 to vector<32x32xf32>
    %131 = arith.mulf %130, %128 : vector<32x32xf32>
    %132 = arith.addf %122, %131 : vector<32x32xf32>
    %c48 = arith.constant 48 : index
    %133 = memref.load %arg2[%c48] : memref<72xf32, #tpu.memory_space<smem>>
    %134 = vector.broadcast %133 : f32 to vector<32x32xf32>
    %135 = arith.mulf %134, %128 : vector<32x32xf32>
    %136 = arith.addf %126, %135 : vector<32x32xf32>
    %c1_51 = arith.constant 1 : index
    %c1_52 = arith.constant 1 : index
    %c1_53 = arith.constant 1 : index
    %137 = vector.load %arg5[%c1_51, %c1_52, %c1_53] : memref<4x34x34xf32, #tpu.memory_space<vmem>>, vector<1x32x32xf32>
    %138 = vector.shape_cast %137 : vector<1x32x32xf32> to vector<32x32xf32>
    %c13 = arith.constant 13 : index
    %139 = memref.load %arg2[%c13] : memref<72xf32, #tpu.memory_space<smem>>
    %140 = vector.broadcast %139 : f32 to vector<32x32xf32>
    %141 = arith.mulf %140, %138 : vector<32x32xf32>
    %142 = arith.addf %132, %141 : vector<32x32xf32>
    %c49 = arith.constant 49 : index
    %143 = memref.load %arg2[%c49] : memref<72xf32, #tpu.memory_space<smem>>
    %144 = vector.broadcast %143 : f32 to vector<32x32xf32>
    %145 = arith.mulf %144, %138 : vector<32x32xf32>
    %146 = arith.addf %136, %145 : vector<32x32xf32>
    %c1_54 = arith.constant 1 : index
    %c1_55 = arith.constant 1 : index
    %c2_56 = arith.constant 2 : index
    %147 = vector.load %arg5[%c1_54, %c1_55, %c2_56] : memref<4x34x34xf32, #tpu.memory_space<vmem>>, vector<1x32x32xf32>
    %148 = vector.shape_cast %147 : vector<1x32x32xf32> to vector<32x32xf32>
    %c14 = arith.constant 14 : index
    %149 = memref.load %arg2[%c14] : memref<72xf32, #tpu.memory_space<smem>>
    %150 = vector.broadcast %149 : f32 to vector<32x32xf32>
    %151 = arith.mulf %150, %148 : vector<32x32xf32>
    %152 = arith.addf %142, %151 : vector<32x32xf32>
    %c50 = arith.constant 50 : index
    %153 = memref.load %arg2[%c50] : memref<72xf32, #tpu.memory_space<smem>>
    %154 = vector.broadcast %153 : f32 to vector<32x32xf32>
    %155 = arith.mulf %154, %148 : vector<32x32xf32>
    %156 = arith.addf %146, %155 : vector<32x32xf32>
    %c1_57 = arith.constant 1 : index
    %c2_58 = arith.constant 2 : index
    %c0_59 = arith.constant 0 : index
    %157 = vector.load %arg5[%c1_57, %c2_58, %c0_59] : memref<4x34x34xf32, #tpu.memory_space<vmem>>, vector<1x32x32xf32>
    %158 = vector.shape_cast %157 : vector<1x32x32xf32> to vector<32x32xf32>
    %c15 = arith.constant 15 : index
    %159 = memref.load %arg2[%c15] : memref<72xf32, #tpu.memory_space<smem>>
    %160 = vector.broadcast %159 : f32 to vector<32x32xf32>
    %161 = arith.mulf %160, %158 : vector<32x32xf32>
    %162 = arith.addf %152, %161 : vector<32x32xf32>
    %c51 = arith.constant 51 : index
    %163 = memref.load %arg2[%c51] : memref<72xf32, #tpu.memory_space<smem>>
    %164 = vector.broadcast %163 : f32 to vector<32x32xf32>
    %165 = arith.mulf %164, %158 : vector<32x32xf32>
    %166 = arith.addf %156, %165 : vector<32x32xf32>
    %c1_60 = arith.constant 1 : index
    %c2_61 = arith.constant 2 : index
    %c1_62 = arith.constant 1 : index
    %167 = vector.load %arg5[%c1_60, %c2_61, %c1_62] : memref<4x34x34xf32, #tpu.memory_space<vmem>>, vector<1x32x32xf32>
    %168 = vector.shape_cast %167 : vector<1x32x32xf32> to vector<32x32xf32>
    %c16 = arith.constant 16 : index
    %169 = memref.load %arg2[%c16] : memref<72xf32, #tpu.memory_space<smem>>
    %170 = vector.broadcast %169 : f32 to vector<32x32xf32>
    %171 = arith.mulf %170, %168 : vector<32x32xf32>
    %172 = arith.addf %162, %171 : vector<32x32xf32>
    %c52 = arith.constant 52 : index
    %173 = memref.load %arg2[%c52] : memref<72xf32, #tpu.memory_space<smem>>
    %174 = vector.broadcast %173 : f32 to vector<32x32xf32>
    %175 = arith.mulf %174, %168 : vector<32x32xf32>
    %176 = arith.addf %166, %175 : vector<32x32xf32>
    %c1_63 = arith.constant 1 : index
    %c2_64 = arith.constant 2 : index
    %c2_65 = arith.constant 2 : index
    %177 = vector.load %arg5[%c1_63, %c2_64, %c2_65] : memref<4x34x34xf32, #tpu.memory_space<vmem>>, vector<1x32x32xf32>
    %178 = vector.shape_cast %177 : vector<1x32x32xf32> to vector<32x32xf32>
    %c17 = arith.constant 17 : index
    %179 = memref.load %arg2[%c17] : memref<72xf32, #tpu.memory_space<smem>>
    %180 = vector.broadcast %179 : f32 to vector<32x32xf32>
    %181 = arith.mulf %180, %178 : vector<32x32xf32>
    %182 = arith.addf %172, %181 : vector<32x32xf32>
    %c53 = arith.constant 53 : index
    %183 = memref.load %arg2[%c53] : memref<72xf32, #tpu.memory_space<smem>>
    %184 = vector.broadcast %183 : f32 to vector<32x32xf32>
    %185 = arith.mulf %184, %178 : vector<32x32xf32>
    %186 = arith.addf %176, %185 : vector<32x32xf32>
    %c2_66 = arith.constant 2 : index
    %c0_67 = arith.constant 0 : index
    %c0_68 = arith.constant 0 : index
    %187 = vector.load %arg5[%c2_66, %c0_67, %c0_68] : memref<4x34x34xf32, #tpu.memory_space<vmem>>, vector<1x32x32xf32>
    %188 = vector.shape_cast %187 : vector<1x32x32xf32> to vector<32x32xf32>
    %c18 = arith.constant 18 : index
    %189 = memref.load %arg2[%c18] : memref<72xf32, #tpu.memory_space<smem>>
    %190 = vector.broadcast %189 : f32 to vector<32x32xf32>
    %191 = arith.mulf %190, %188 : vector<32x32xf32>
    %192 = arith.addf %182, %191 : vector<32x32xf32>
    %c54 = arith.constant 54 : index
    %193 = memref.load %arg2[%c54] : memref<72xf32, #tpu.memory_space<smem>>
    %194 = vector.broadcast %193 : f32 to vector<32x32xf32>
    %195 = arith.mulf %194, %188 : vector<32x32xf32>
    %196 = arith.addf %186, %195 : vector<32x32xf32>
    %c2_69 = arith.constant 2 : index
    %c0_70 = arith.constant 0 : index
    %c1_71 = arith.constant 1 : index
    %197 = vector.load %arg5[%c2_69, %c0_70, %c1_71] : memref<4x34x34xf32, #tpu.memory_space<vmem>>, vector<1x32x32xf32>
    %198 = vector.shape_cast %197 : vector<1x32x32xf32> to vector<32x32xf32>
    %c19 = arith.constant 19 : index
    %199 = memref.load %arg2[%c19] : memref<72xf32, #tpu.memory_space<smem>>
    %200 = vector.broadcast %199 : f32 to vector<32x32xf32>
    %201 = arith.mulf %200, %198 : vector<32x32xf32>
    %202 = arith.addf %192, %201 : vector<32x32xf32>
    %c55 = arith.constant 55 : index
    %203 = memref.load %arg2[%c55] : memref<72xf32, #tpu.memory_space<smem>>
    %204 = vector.broadcast %203 : f32 to vector<32x32xf32>
    %205 = arith.mulf %204, %198 : vector<32x32xf32>
    %206 = arith.addf %196, %205 : vector<32x32xf32>
    %c2_72 = arith.constant 2 : index
    %c0_73 = arith.constant 0 : index
    %c2_74 = arith.constant 2 : index
    %207 = vector.load %arg5[%c2_72, %c0_73, %c2_74] : memref<4x34x34xf32, #tpu.memory_space<vmem>>, vector<1x32x32xf32>
    %208 = vector.shape_cast %207 : vector<1x32x32xf32> to vector<32x32xf32>
    %c20 = arith.constant 20 : index
    %209 = memref.load %arg2[%c20] : memref<72xf32, #tpu.memory_space<smem>>
    %210 = vector.broadcast %209 : f32 to vector<32x32xf32>
    %211 = arith.mulf %210, %208 : vector<32x32xf32>
    %212 = arith.addf %202, %211 : vector<32x32xf32>
    %c56 = arith.constant 56 : index
    %213 = memref.load %arg2[%c56] : memref<72xf32, #tpu.memory_space<smem>>
    %214 = vector.broadcast %213 : f32 to vector<32x32xf32>
    %215 = arith.mulf %214, %208 : vector<32x32xf32>
    %216 = arith.addf %206, %215 : vector<32x32xf32>
    %c2_75 = arith.constant 2 : index
    %c1_76 = arith.constant 1 : index
    %c0_77 = arith.constant 0 : index
    %217 = vector.load %arg5[%c2_75, %c1_76, %c0_77] : memref<4x34x34xf32, #tpu.memory_space<vmem>>, vector<1x32x32xf32>
    %218 = vector.shape_cast %217 : vector<1x32x32xf32> to vector<32x32xf32>
    %c21 = arith.constant 21 : index
    %219 = memref.load %arg2[%c21] : memref<72xf32, #tpu.memory_space<smem>>
    %220 = vector.broadcast %219 : f32 to vector<32x32xf32>
    %221 = arith.mulf %220, %218 : vector<32x32xf32>
    %222 = arith.addf %212, %221 : vector<32x32xf32>
    %c57 = arith.constant 57 : index
    %223 = memref.load %arg2[%c57] : memref<72xf32, #tpu.memory_space<smem>>
    %224 = vector.broadcast %223 : f32 to vector<32x32xf32>
    %225 = arith.mulf %224, %218 : vector<32x32xf32>
    %226 = arith.addf %216, %225 : vector<32x32xf32>
    %c2_78 = arith.constant 2 : index
    %c1_79 = arith.constant 1 : index
    %c1_80 = arith.constant 1 : index
    %227 = vector.load %arg5[%c2_78, %c1_79, %c1_80] : memref<4x34x34xf32, #tpu.memory_space<vmem>>, vector<1x32x32xf32>
    %228 = vector.shape_cast %227 : vector<1x32x32xf32> to vector<32x32xf32>
    %c22 = arith.constant 22 : index
    %229 = memref.load %arg2[%c22] : memref<72xf32, #tpu.memory_space<smem>>
    %230 = vector.broadcast %229 : f32 to vector<32x32xf32>
    %231 = arith.mulf %230, %228 : vector<32x32xf32>
    %232 = arith.addf %222, %231 : vector<32x32xf32>
    %c58 = arith.constant 58 : index
    %233 = memref.load %arg2[%c58] : memref<72xf32, #tpu.memory_space<smem>>
    %234 = vector.broadcast %233 : f32 to vector<32x32xf32>
    %235 = arith.mulf %234, %228 : vector<32x32xf32>
    %236 = arith.addf %226, %235 : vector<32x32xf32>
    %c2_81 = arith.constant 2 : index
    %c1_82 = arith.constant 1 : index
    %c2_83 = arith.constant 2 : index
    %237 = vector.load %arg5[%c2_81, %c1_82, %c2_83] : memref<4x34x34xf32, #tpu.memory_space<vmem>>, vector<1x32x32xf32>
    %238 = vector.shape_cast %237 : vector<1x32x32xf32> to vector<32x32xf32>
    %c23 = arith.constant 23 : index
    %239 = memref.load %arg2[%c23] : memref<72xf32, #tpu.memory_space<smem>>
    %240 = vector.broadcast %239 : f32 to vector<32x32xf32>
    %241 = arith.mulf %240, %238 : vector<32x32xf32>
    %242 = arith.addf %232, %241 : vector<32x32xf32>
    %c59 = arith.constant 59 : index
    %243 = memref.load %arg2[%c59] : memref<72xf32, #tpu.memory_space<smem>>
    %244 = vector.broadcast %243 : f32 to vector<32x32xf32>
    %245 = arith.mulf %244, %238 : vector<32x32xf32>
    %246 = arith.addf %236, %245 : vector<32x32xf32>
    %c2_84 = arith.constant 2 : index
    %c2_85 = arith.constant 2 : index
    %c0_86 = arith.constant 0 : index
    %247 = vector.load %arg5[%c2_84, %c2_85, %c0_86] : memref<4x34x34xf32, #tpu.memory_space<vmem>>, vector<1x32x32xf32>
    %248 = vector.shape_cast %247 : vector<1x32x32xf32> to vector<32x32xf32>
    %c24 = arith.constant 24 : index
    %249 = memref.load %arg2[%c24] : memref<72xf32, #tpu.memory_space<smem>>
    %250 = vector.broadcast %249 : f32 to vector<32x32xf32>
    %251 = arith.mulf %250, %248 : vector<32x32xf32>
    %252 = arith.addf %242, %251 : vector<32x32xf32>
    %c60 = arith.constant 60 : index
    %253 = memref.load %arg2[%c60] : memref<72xf32, #tpu.memory_space<smem>>
    %254 = vector.broadcast %253 : f32 to vector<32x32xf32>
    %255 = arith.mulf %254, %248 : vector<32x32xf32>
    %256 = arith.addf %246, %255 : vector<32x32xf32>
    %c2_87 = arith.constant 2 : index
    %c2_88 = arith.constant 2 : index
    %c1_89 = arith.constant 1 : index
    %257 = vector.load %arg5[%c2_87, %c2_88, %c1_89] : memref<4x34x34xf32, #tpu.memory_space<vmem>>, vector<1x32x32xf32>
    %258 = vector.shape_cast %257 : vector<1x32x32xf32> to vector<32x32xf32>
    %c25 = arith.constant 25 : index
    %259 = memref.load %arg2[%c25] : memref<72xf32, #tpu.memory_space<smem>>
    %260 = vector.broadcast %259 : f32 to vector<32x32xf32>
    %261 = arith.mulf %260, %258 : vector<32x32xf32>
    %262 = arith.addf %252, %261 : vector<32x32xf32>
    %c61 = arith.constant 61 : index
    %263 = memref.load %arg2[%c61] : memref<72xf32, #tpu.memory_space<smem>>
    %264 = vector.broadcast %263 : f32 to vector<32x32xf32>
    %265 = arith.mulf %264, %258 : vector<32x32xf32>
    %266 = arith.addf %256, %265 : vector<32x32xf32>
    %c2_90 = arith.constant 2 : index
    %c2_91 = arith.constant 2 : index
    %c2_92 = arith.constant 2 : index
    %267 = vector.load %arg5[%c2_90, %c2_91, %c2_92] : memref<4x34x34xf32, #tpu.memory_space<vmem>>, vector<1x32x32xf32>
    %268 = vector.shape_cast %267 : vector<1x32x32xf32> to vector<32x32xf32>
    %c26 = arith.constant 26 : index
    %269 = memref.load %arg2[%c26] : memref<72xf32, #tpu.memory_space<smem>>
    %270 = vector.broadcast %269 : f32 to vector<32x32xf32>
    %271 = arith.mulf %270, %268 : vector<32x32xf32>
    %272 = arith.addf %262, %271 : vector<32x32xf32>
    %c62 = arith.constant 62 : index
    %273 = memref.load %arg2[%c62] : memref<72xf32, #tpu.memory_space<smem>>
    %274 = vector.broadcast %273 : f32 to vector<32x32xf32>
    %275 = arith.mulf %274, %268 : vector<32x32xf32>
    %276 = arith.addf %266, %275 : vector<32x32xf32>
    %c3_93 = arith.constant 3 : index
    %c0_94 = arith.constant 0 : index
    %c0_95 = arith.constant 0 : index
    %277 = vector.load %arg5[%c3_93, %c0_94, %c0_95] : memref<4x34x34xf32, #tpu.memory_space<vmem>>, vector<1x32x32xf32>
    %278 = vector.shape_cast %277 : vector<1x32x32xf32> to vector<32x32xf32>
    %c27 = arith.constant 27 : index
    %279 = memref.load %arg2[%c27] : memref<72xf32, #tpu.memory_space<smem>>
    %280 = vector.broadcast %279 : f32 to vector<32x32xf32>
    %281 = arith.mulf %280, %278 : vector<32x32xf32>
    %282 = arith.addf %272, %281 : vector<32x32xf32>
    %c63 = arith.constant 63 : index
    %283 = memref.load %arg2[%c63] : memref<72xf32, #tpu.memory_space<smem>>
    %284 = vector.broadcast %283 : f32 to vector<32x32xf32>
    %285 = arith.mulf %284, %278 : vector<32x32xf32>
    %286 = arith.addf %276, %285 : vector<32x32xf32>
    %c3_96 = arith.constant 3 : index
    %c0_97 = arith.constant 0 : index
    %c1_98 = arith.constant 1 : index
    %287 = vector.load %arg5[%c3_96, %c0_97, %c1_98] : memref<4x34x34xf32, #tpu.memory_space<vmem>>, vector<1x32x32xf32>
    %288 = vector.shape_cast %287 : vector<1x32x32xf32> to vector<32x32xf32>
    %c28 = arith.constant 28 : index
    %289 = memref.load %arg2[%c28] : memref<72xf32, #tpu.memory_space<smem>>
    %290 = vector.broadcast %289 : f32 to vector<32x32xf32>
    %291 = arith.mulf %290, %288 : vector<32x32xf32>
    %292 = arith.addf %282, %291 : vector<32x32xf32>
    %c64 = arith.constant 64 : index
    %293 = memref.load %arg2[%c64] : memref<72xf32, #tpu.memory_space<smem>>
    %294 = vector.broadcast %293 : f32 to vector<32x32xf32>
    %295 = arith.mulf %294, %288 : vector<32x32xf32>
    %296 = arith.addf %286, %295 : vector<32x32xf32>
    %c3_99 = arith.constant 3 : index
    %c0_100 = arith.constant 0 : index
    %c2_101 = arith.constant 2 : index
    %297 = vector.load %arg5[%c3_99, %c0_100, %c2_101] : memref<4x34x34xf32, #tpu.memory_space<vmem>>, vector<1x32x32xf32>
    %298 = vector.shape_cast %297 : vector<1x32x32xf32> to vector<32x32xf32>
    %c29 = arith.constant 29 : index
    %299 = memref.load %arg2[%c29] : memref<72xf32, #tpu.memory_space<smem>>
    %300 = vector.broadcast %299 : f32 to vector<32x32xf32>
    %301 = arith.mulf %300, %298 : vector<32x32xf32>
    %302 = arith.addf %292, %301 : vector<32x32xf32>
    %c65 = arith.constant 65 : index
    %303 = memref.load %arg2[%c65] : memref<72xf32, #tpu.memory_space<smem>>
    %304 = vector.broadcast %303 : f32 to vector<32x32xf32>
    %305 = arith.mulf %304, %298 : vector<32x32xf32>
    %306 = arith.addf %296, %305 : vector<32x32xf32>
    %c3_102 = arith.constant 3 : index
    %c1_103 = arith.constant 1 : index
    %c0_104 = arith.constant 0 : index
    %307 = vector.load %arg5[%c3_102, %c1_103, %c0_104] : memref<4x34x34xf32, #tpu.memory_space<vmem>>, vector<1x32x32xf32>
    %308 = vector.shape_cast %307 : vector<1x32x32xf32> to vector<32x32xf32>
    %c30 = arith.constant 30 : index
    %309 = memref.load %arg2[%c30] : memref<72xf32, #tpu.memory_space<smem>>
    %310 = vector.broadcast %309 : f32 to vector<32x32xf32>
    %311 = arith.mulf %310, %308 : vector<32x32xf32>
    %312 = arith.addf %302, %311 : vector<32x32xf32>
    %c66 = arith.constant 66 : index
    %313 = memref.load %arg2[%c66] : memref<72xf32, #tpu.memory_space<smem>>
    %314 = vector.broadcast %313 : f32 to vector<32x32xf32>
    %315 = arith.mulf %314, %308 : vector<32x32xf32>
    %316 = arith.addf %306, %315 : vector<32x32xf32>
    %c3_105 = arith.constant 3 : index
    %c1_106 = arith.constant 1 : index
    %c1_107 = arith.constant 1 : index
    %317 = vector.load %arg5[%c3_105, %c1_106, %c1_107] : memref<4x34x34xf32, #tpu.memory_space<vmem>>, vector<1x32x32xf32>
    %318 = vector.shape_cast %317 : vector<1x32x32xf32> to vector<32x32xf32>
    %c31 = arith.constant 31 : index
    %319 = memref.load %arg2[%c31] : memref<72xf32, #tpu.memory_space<smem>>
    %320 = vector.broadcast %319 : f32 to vector<32x32xf32>
    %321 = arith.mulf %320, %318 : vector<32x32xf32>
    %322 = arith.addf %312, %321 : vector<32x32xf32>
    %c67 = arith.constant 67 : index
    %323 = memref.load %arg2[%c67] : memref<72xf32, #tpu.memory_space<smem>>
    %324 = vector.broadcast %323 : f32 to vector<32x32xf32>
    %325 = arith.mulf %324, %318 : vector<32x32xf32>
    %326 = arith.addf %316, %325 : vector<32x32xf32>
    %c3_108 = arith.constant 3 : index
    %c1_109 = arith.constant 1 : index
    %c2_110 = arith.constant 2 : index
    %327 = vector.load %arg5[%c3_108, %c1_109, %c2_110] : memref<4x34x34xf32, #tpu.memory_space<vmem>>, vector<1x32x32xf32>
    %328 = vector.shape_cast %327 : vector<1x32x32xf32> to vector<32x32xf32>
    %c32 = arith.constant 32 : index
    %329 = memref.load %arg2[%c32] : memref<72xf32, #tpu.memory_space<smem>>
    %330 = vector.broadcast %329 : f32 to vector<32x32xf32>
    %331 = arith.mulf %330, %328 : vector<32x32xf32>
    %332 = arith.addf %322, %331 : vector<32x32xf32>
    %c68 = arith.constant 68 : index
    %333 = memref.load %arg2[%c68] : memref<72xf32, #tpu.memory_space<smem>>
    %334 = vector.broadcast %333 : f32 to vector<32x32xf32>
    %335 = arith.mulf %334, %328 : vector<32x32xf32>
    %336 = arith.addf %326, %335 : vector<32x32xf32>
    %c3_111 = arith.constant 3 : index
    %c2_112 = arith.constant 2 : index
    %c0_113 = arith.constant 0 : index
    %337 = vector.load %arg5[%c3_111, %c2_112, %c0_113] : memref<4x34x34xf32, #tpu.memory_space<vmem>>, vector<1x32x32xf32>
    %338 = vector.shape_cast %337 : vector<1x32x32xf32> to vector<32x32xf32>
    %c33 = arith.constant 33 : index
    %339 = memref.load %arg2[%c33] : memref<72xf32, #tpu.memory_space<smem>>
    %340 = vector.broadcast %339 : f32 to vector<32x32xf32>
    %341 = arith.mulf %340, %338 : vector<32x32xf32>
    %342 = arith.addf %332, %341 : vector<32x32xf32>
    %c69 = arith.constant 69 : index
    %343 = memref.load %arg2[%c69] : memref<72xf32, #tpu.memory_space<smem>>
    %344 = vector.broadcast %343 : f32 to vector<32x32xf32>
    %345 = arith.mulf %344, %338 : vector<32x32xf32>
    %346 = arith.addf %336, %345 : vector<32x32xf32>
    %c3_114 = arith.constant 3 : index
    %c2_115 = arith.constant 2 : index
    %c1_116 = arith.constant 1 : index
    %347 = vector.load %arg5[%c3_114, %c2_115, %c1_116] : memref<4x34x34xf32, #tpu.memory_space<vmem>>, vector<1x32x32xf32>
    %348 = vector.shape_cast %347 : vector<1x32x32xf32> to vector<32x32xf32>
    %c34 = arith.constant 34 : index
    %349 = memref.load %arg2[%c34] : memref<72xf32, #tpu.memory_space<smem>>
    %350 = vector.broadcast %349 : f32 to vector<32x32xf32>
    %351 = arith.mulf %350, %348 : vector<32x32xf32>
    %352 = arith.addf %342, %351 : vector<32x32xf32>
    %c70 = arith.constant 70 : index
    %353 = memref.load %arg2[%c70] : memref<72xf32, #tpu.memory_space<smem>>
    %354 = vector.broadcast %353 : f32 to vector<32x32xf32>
    %355 = arith.mulf %354, %348 : vector<32x32xf32>
    %356 = arith.addf %346, %355 : vector<32x32xf32>
    %c3_117 = arith.constant 3 : index
    %c2_118 = arith.constant 2 : index
    %c2_119 = arith.constant 2 : index
    %357 = vector.load %arg5[%c3_117, %c2_118, %c2_119] : memref<4x34x34xf32, #tpu.memory_space<vmem>>, vector<1x32x32xf32>
    %358 = vector.shape_cast %357 : vector<1x32x32xf32> to vector<32x32xf32>
    %c35 = arith.constant 35 : index
    %359 = memref.load %arg2[%c35] : memref<72xf32, #tpu.memory_space<smem>>
    %360 = vector.broadcast %359 : f32 to vector<32x32xf32>
    %361 = arith.mulf %360, %358 : vector<32x32xf32>
    %362 = arith.addf %352, %361 : vector<32x32xf32>
    %c71 = arith.constant 71 : index
    %363 = memref.load %arg2[%c71] : memref<72xf32, #tpu.memory_space<smem>>
    %364 = vector.broadcast %363 : f32 to vector<32x32xf32>
    %365 = arith.mulf %364, %358 : vector<32x32xf32>
    %366 = arith.addf %356, %365 : vector<32x32xf32>
    %c0_120 = arith.constant 0 : index
    %367 = memref.load %arg3[%c0_120] : memref<2xf32, #tpu.memory_space<smem>>
    %368 = vector.broadcast %367 : f32 to vector<32x32xf32>
    %369 = arith.addf %362, %368 : vector<32x32xf32>
    %cst_121 = arith.constant 0.000000e+00 : f32
    %370 = vector.broadcast %cst_121 : f32 to vector<32x32xf32>
    %371 = arith.minimumf %369, %370 : vector<32x32xf32>
    %372 = math.exp %371 : vector<32x32xf32>
    %cst_122 = arith.constant 1.000000e+00 : f32
    %373 = vector.broadcast %cst_122 : f32 to vector<32x32xf32>
    %374 = arith.subf %372, %373 : vector<32x32xf32>
    %cst_123 = arith.constant 1.67326319 : f32
    %375 = vector.broadcast %cst_123 : f32 to vector<32x32xf32>
    %376 = arith.mulf %375, %374 : vector<32x32xf32>
    %cst_124 = arith.constant 0.000000e+00 : f32
    %377 = vector.broadcast %cst_124 : f32 to vector<32x32xf32>
    %378 = arith.cmpf ogt, %369, %377 : vector<32x32xf32>
    %379 = arith.select %378, %369, %376 : vector<32x32xi1>, vector<32x32xf32>
    %cst_125 = arith.constant 1.05070102 : f32
    %380 = vector.broadcast %cst_125 : f32 to vector<32x32xf32>
    %381 = arith.mulf %380, %379 : vector<32x32xf32>
    %cst_126 = arith.constant 0.000000e+00 : f32
    %382 = vector.broadcast %cst_126 : f32 to vector<32x32xf32>
    %383 = arith.subf %382, %381 : vector<32x32xf32>
    %384 = math.exp %383 : vector<32x32xf32>
    %cst_127 = arith.constant 1.000000e+00 : f32
    %385 = vector.broadcast %cst_127 : f32 to vector<32x32xf32>
    %386 = arith.addf %385, %384 : vector<32x32xf32>
    %cst_128 = arith.constant 1.000000e+00 : f32
    %387 = vector.broadcast %cst_128 : f32 to vector<32x32xf32>
    %388 = arith.divf %387, %386 : vector<32x32xf32>
    %c0_129 = arith.constant 0 : index
    %c0_130 = arith.constant 0 : index
    %c0_131 = arith.constant 0 : index
    %c0_132 = arith.constant 0 : index
    %389 = vector.load %arg4[%c0_129, %c0_130, %c0_131, %c0_132] : memref<1x2x32x32xf32, #tpu.memory_space<vmem>>, vector<1x1x32x32xf32>
    %390 = vector.shape_cast %389 : vector<1x1x32x32xf32> to vector<32x32xf32>
    %391 = vector.shape_cast %388 : vector<32x32xf32> to vector<1x1x32x32xf32>
    tpu.vector_store %arg4[%c0_129, %c0_130, %c0_131, %c0_132], %391 {strides = array<i32>} : memref<1x2x32x32xf32, #tpu.memory_space<vmem>>, vector<1x1x32x32xf32>,
    %c1_133 = arith.constant 1 : index
    %392 = memref.load %arg3[%c1_133] : memref<2xf32, #tpu.memory_space<smem>>
    %393 = vector.broadcast %392 : f32 to vector<32x32xf32>
    %394 = arith.addf %366, %393 : vector<32x32xf32>
    %cst_134 = arith.constant 0.000000e+00 : f32
    %395 = vector.broadcast %cst_134 : f32 to vector<32x32xf32>
    %396 = arith.minimumf %394, %395 : vector<32x32xf32>
    %397 = math.exp %396 : vector<32x32xf32>
    %cst_135 = arith.constant 1.000000e+00 : f32
    %398 = vector.broadcast %cst_135 : f32 to vector<32x32xf32>
    %399 = arith.subf %397, %398 : vector<32x32xf32>
    %cst_136 = arith.constant 1.67326319 : f32
    %400 = vector.broadcast %cst_136 : f32 to vector<32x32xf32>
    %401 = arith.mulf %400, %399 : vector<32x32xf32>
    %cst_137 = arith.constant 0.000000e+00 : f32
    %402 = vector.broadcast %cst_137 : f32 to vector<32x32xf32>
    %403 = arith.cmpf ogt, %394, %402 : vector<32x32xf32>
    %404 = arith.select %403, %394, %401 : vector<32x32xi1>, vector<32x32xf32>
    %cst_138 = arith.constant 1.05070102 : f32
    %405 = vector.broadcast %cst_138 : f32 to vector<32x32xf32>
    %406 = arith.mulf %405, %404 : vector<32x32xf32>
    %cst_139 = arith.constant 0.000000e+00 : f32
    %407 = vector.broadcast %cst_139 : f32 to vector<32x32xf32>
    %408 = arith.subf %407, %406 : vector<32x32xf32>
    %409 = math.exp %408 : vector<32x32xf32>
    %cst_140 = arith.constant 1.000000e+00 : f32
    %410 = vector.broadcast %cst_140 : f32 to vector<32x32xf32>
    %411 = arith.addf %410, %409 : vector<32x32xf32>
    %cst_141 = arith.constant 1.000000e+00 : f32
    %412 = vector.broadcast %cst_141 : f32 to vector<32x32xf32>
    %413 = arith.divf %412, %411 : vector<32x32xf32>
    %c0_142 = arith.constant 0 : index
    %c1_143 = arith.constant 1 : index
    %c0_144 = arith.constant 0 : index
    %c0_145 = arith.constant 0 : index
    %414 = vector.load %arg4[%c0_142, %c1_143, %c0_144, %c0_145] : memref<1x2x32x32xf32, #tpu.memory_space<vmem>>, vector<1x1x32x32xf32>
    %415 = vector.shape_cast %414 : vector<1x1x32x32xf32> to vector<32x32xf32>
    %416 = vector.shape_cast %413 : vector<32x32xf32> to vector<1x1x32x32xf32>
    tpu.vector_store %arg4[%c0_142, %c1_143, %c0_144, %c0_145], %416 {strides = array<i32>} : memref<1x2x32x32xf32, #tpu.memory_space<vmem>>, vector<1x1x32x32xf32>,
    return
  }
  func.func @transform_0(%arg0: i32) -> (i32, i32, i32, i32) {
    %c0_i32 = arith.constant 0 : i32
    %c0_i32_0 = arith.constant 0 : i32
    %c0_i32_1 = arith.constant 0 : i32
    %c0_i32_2 = arith.constant 0 : i32
    return %arg0, %c0_i32, %c0_i32_0, %c0_i32_1 : i32, i32, i32, i32
  }
  func.func @transform_1(%arg0: i32) -> i32 {
    %c0_i32 = arith.constant 0 : i32
    %c0_i32_0 = arith.constant 0 : i32
    return %c0_i32 : i32
  }
  func.func @transform_2(%arg0: i32) -> i32 {
    %c0_i32 = arith.constant 0 : i32
    %c0_i32_0 = arith.constant 0 : i32
    return %c0_i32 : i32
  }
  func.func @transform_3(%arg0: i32) -> (i32, i32, i32, i32) {
    %c0_i32 = arith.constant 0 : i32
    %c0_i32_0 = arith.constant 0 : i32
    %c0_i32_1 = arith.constant 0 : i32
    %c0_i32_2 = arith.constant 0 : i32
    return %arg0, %c0_i32, %c0_i32_0, %c0_i32_1 : i32, i32, i32, i32
  }
}

</mosaic_0001>

<llo_original>
// kernel: conv_selu_sigmoid.1
$region0: #{conv_selu_sigmoid.1}
  #allocation0 [shape = 'u32[]', space=smem, size = 0x4, offset = 0x4, fixed_abs, tag = 'smem constant byte address 0x4 - core index']
  #allocation1 [shape = 'u32[144,128]{1,0:T(1,128)}', space=vmem, size = 0x12000, scoped, tag = 'internal scratch']
  #allocation2 [shape = 'f32[4,34,34]{2,1,0:T(8,128)}', space=vmem, size = 0x14000, scoped, tag = 'scratch operand']
  %s0 = inlined_call_operand.hbm [shape: f32[2,4,32,32], index: 0, kind: input, shape index: {}]
  %s1 = inlined_call_operand.vmem [shape: f32[72], index: 1, kind: input, shape index: {}]
  %s2 = inlined_call_operand.vmem [shape: f32[2], index: 2, kind: input, shape index: {}]
  %s3 = inlined_call_operand.hbm [shape: f32[2,2,32,32], index: 3, kind: output, shape index: {}]
  %s4 = sld [smem:[#allocation0]]
  $region57: #{conv_selu_sigmoid.1} parent=0
    _
  %s6 = ssub.s32 1, %s4
  %s7 = scalar_select 0, %s6, %s4
  $region1: #{conv_selu_sigmoid.1} parent=0
    #allocation3 [shape = 'u8[131072]{0}', space=vmem, size = 0x20000, scoped, tag = 'input window, operand 0']
    #allocation4 [shape = 's32[2]{0}', space=sflag, size = 0x8, scoped, tag = 'scoped memory for conv_selu_sigmoid.1']
    #allocation5 [shape = 's32[2]{0}', space=sflag, size = 0x8, scoped, tag = 'scoped memory for conv_selu_sigmoid.1']
    #allocation6 [shape = 's32[2]{0}', space=sflag, size = 0x8, scoped, tag = 'scoped memory for conv_selu_sigmoid.1']
    #allocation7 [shape = 'u8[512]{0}', space=smem, size = 0x200, scoped, tag = 'input window, operand 1, single buffered']
    #allocation8 [shape = 'u8[512]{0}', space=smem, size = 0x200, scoped, tag = 'input window, operand 2, single buffered']
    #allocation9 [shape = 's32[1]{0}', space=sflag, size = 0x4, scoped, tag = 'scoped memory for conv_selu_sigmoid.1']
    #allocation10 [shape = 'u8[65536]{0}', space=vmem, size = 0x10000, scoped, tag = 'output window, operand 0']
    %8 = vsyncpa [#allocation4], 0
    %s9 = scalar_lea.sflag [#allocation4], 1
    %10 = vsyncpa %s9, 0
    %11 = vsyncpa [#allocation6], 0
    %12 = vsyncpa [#allocation9], 0
    %13 = vsyncpa [#allocation5], 0
    %s14 = scalar_lea.sflag [#allocation5], 1
    %15 = vsyncpa %s14, 0
    loop: start=0, step=1, limit=4
    $region2: #{conv_selu_sigmoid.1} parent=1 // loop_pre_header
      _
    $region3: #{conv_selu_sigmoid.1} parent=1 // loop_header
      %s17 = sphi 0, %s21
      %p18 = scmp.ge.s32.totalorder %s17, 4
      %s27 = sphi 0, %s29
      %s30 = sphi 0, %s27
      %s31 = sphi 0, %s30
      %s47 = sphi 0, %s31
      %s51 = sphi 0, %s51
      %s53 = sphi 0, %s51
      %s54 = sphi 0, %s53
      %s68 = sphi 0, %s54
      %s72 = sphi 0, %s72
      %s74 = sphi 0, %s72
      %s75 = sphi 0, %s74
      %s89 = sphi 0, %s75
      %s95 = sphi 0, %s97
      %s98 = sphi 0, %s95
      %s99 = sphi 0, %s98
      %s115 = sphi 0, %s99
    $region4: #{conv_selu_sigmoid.1} parent=1 // loop_header_branch
      %20 = sbr.rel (%p18) target = $region8
    $region5: #{conv_selu_sigmoid.1} parent=1 // loop_body
      %s22 = ssub.s32 %s17, 1
      %s23 = ssub.s32 %s17, 2
      %s24 = sadd.s32 %s17, 1
      %s25 = ssub.s32 %s17, %s24
      %p26 = scmp.eq.s32.totalorder %s25, 0
      %s28 = sadd.s32 %s27, 1
      %s29 = scalar_select %p26, %s27, %s28
      %p32 = pneg %p26
      %p33 = scmp.eq.s32.totalorder %s17, 1
      %p34 = por %p32, %p33
      %p35 = scmp.ne.s32.totalorder %s27, %s30
      %p36 = scmp.eq.s32.totalorder %s17, 0
      %p37 = por %p35, %p36
      %p38 = scmp.ne.s32.totalorder %s27, %s30
      %p39 = scmp.eq.s32.totalorder %s22, 1
      %p40 = por %p38, %p39
      %p41 = scmp.ne.s32.totalorder %s30, %s31
      %p42 = scmp.eq.s32.totalorder %s22, 0
      %p43 = por %p41, %p42
      %p44 = scmp.ne.s32.totalorder %s30, %s31
      %p45 = scmp.eq.s32.totalorder %s23, 1
      %p46 = por %p44, %p45
      %p48 = scmp.ne.s32.totalorder %s31, %s47
      %p49 = scmp.eq.s32.totalorder %s23, 0
      %p50 = por %p48, %p49
      %s52 = sadd.s32 %s51, 1
      %p55 = scmp.eq.s32.totalorder %s17, 1
      %p56 = scmp.ne.s32.totalorder %s51, %s53
      %p57 = scmp.eq.s32.totalorder %s17, 0
      %p58 = por %p56, %p57
      %p59 = scmp.ne.s32.totalorder %s51, %s53
      %p60 = scmp.eq.s32.totalorder %s22, 1
      %p61 = por %p59, %p60
      %p62 = scmp.ne.s32.totalorder %s53, %s54
      %p63 = scmp.eq.s32.totalorder %s22, 0
      %p64 = por %p62, %p63
      %p65 = scmp.ne.s32.totalorder %s53, %s54
      %p66 = scmp.eq.s32.totalorder %s23, 1
      %p67 = por %p65, %p66
      %p69 = scmp.ne.s32.totalorder %s54, %s68
      %p70 = scmp.eq.s32.totalorder %s23, 0
      %p71 = por %p69, %p70
      %s73 = sadd.s32 %s72, 1
      %p76 = scmp.eq.s32.totalorder %s17, 1
      %p77 = scmp.ne.s32.totalorder %s72, %s74
      %p78 = scmp.eq.s32.totalorder %s17, 0
      %p79 = por %p77, %p78
      %p80 = scmp.ne.s32.totalorder %s72, %s74
      %p81 = scmp.eq.s32.totalorder %s22, 1
      %p82 = por %p80, %p81
      %p83 = scmp.ne.s32.totalorder %s74, %s75
      %p84 = scmp.eq.s32.totalorder %s22, 0
      %p85 = por %p83, %p84
      %p86 = scmp.ne.s32.totalorder %s74, %s75
      %p87 = scmp.eq.s32.totalorder %s23, 1
      %p88 = por %p86, %p87
      %p90 = scmp.ne.s32.totalorder %s75, %s89
      %p91 = scmp.eq.s32.totalorder %s23, 0
      %p92 = por %p90, %p91
      %s93 = ssub.s32 %s17, %s24
      %p94 = scmp.eq.s32.totalorder %s93, 0
      %s96 = sadd.s32 %s95, 1
      %s97 = scalar_select %p94, %s95, %s96
      %p100 = pneg %p94
      %p101 = scmp.eq.s32.totalorder %s17, 1
      %p102 = por %p100, %p101
      %p103 = scmp.ne.s32.totalorder %s95, %s98
      %p104 = scmp.eq.s32.totalorder %s17, 0
      %p105 = por %p103, %p104
      %p106 = scmp.ne.s32.totalorder %s95, %s98
      %p107 = scmp.eq.s32.totalorder %s22, 1
      %p108 = por %p106, %p107
      %p109 = scmp.ne.s32.totalorder %s98, %s99
      %p110 = scmp.eq.s32.totalorder %s22, 0
      %p111 = por %p109, %p110
      %p112 = scmp.ne.s32.totalorder %s98, %s99
      %p113 = scmp.eq.s32.totalorder %s23, 1
      %p114 = por %p112, %p113
      %p116 = scmp.ne.s32.totalorder %s99, %s115
      %p117 = scmp.eq.s32.totalorder %s23, 0
      %p118 = por %p116, %p117
      %p119 = scmp.le.s32.totalorder 1, %s17
      %p120 = scmp.lt.s32.totalorder %s17, 3
      %p121 = pnand %p119, %p120
      %p122 = pneg %p121
      // Predicated region
      $region9: #{conv_selu_sigmoid.1} parent=5 // pred_check
        _
      $region10: #{conv_selu_sigmoid.1} parent=5 // pred_check_branch
        %124 = sbr.rel (%p121) target = $region12
      $region11: #{conv_selu_sigmoid.1} parent=5 // pred_region
        %s125 = ssub.s32 %s17, 1
        // Predicated region
        $region13: #{conv_selu_sigmoid.1} parent=11 // pred_check
          %p126 = pneg %p64
        $region14: #{conv_selu_sigmoid.1} parent=11 // pred_check_branch
          %128 = sbr.rel (%p126) target = $region16
        $region15: #{conv_selu_sigmoid.1} parent=11 // pred_region
          %s130 = ssub.s32 16, 16
          %131 = vsyncadd [#allocation6], %s130
          %s133 = sshll.u32 %s1, 4
          %s134 = int_to_ptr.vmem [resolvable:$true] %s133
          %136 = dma.vmem_to_smem %s134, 16, [#allocation7], [#allocation6]
        $region16: #{conv_selu_sigmoid.1} parent=11 // pred_fallthru
          _
        // Predicated region
        $region17: #{conv_selu_sigmoid.1} parent=11 // pred_check
          %p137 = pneg %p85
        $region18: #{conv_selu_sigmoid.1} parent=11 // pred_check_branch
          %139 = sbr.rel (%p137) target = $region20
        $region19: #{conv_selu_sigmoid.1} parent=11 // pred_region
          %s141 = ssub.s32 16, 16
          %142 = vsyncadd [#allocation9], %s141
          %s144 = sshll.u32 %s2, 4
          %s145 = int_to_ptr.vmem [resolvable:$true] %s144
          %147 = dma.vmem_to_smem %s145, 16, [#allocation8], [#allocation9]
        $region20: #{conv_selu_sigmoid.1} parent=11 // pred_fallthru
          _
      $region12: #{conv_selu_sigmoid.1} parent=5 // pred_fallthru
        _
      %p148 = scmp.lt.s32.totalorder %s17, 2
      // Predicated region
      $region21: #{conv_selu_sigmoid.1} parent=5 // pred_check
        %p149 = pneg %p148
      $region22: #{conv_selu_sigmoid.1} parent=5 // pred_check_branch
        %151 = sbr.rel (%p149) target = $region24
      $region23: #{conv_selu_sigmoid.1} parent=5 // pred_region
        // Predicated region
        $region25: #{conv_selu_sigmoid.1} parent=23 // pred_check
          %p152 = pneg %p37
        $region26: #{conv_selu_sigmoid.1} parent=23 // pred_check_branch
          %154 = sbr.rel (%p152) target = $region28
        $region27: #{conv_selu_sigmoid.1} parent=23 // pred_region
          %s155 = sand.u32 %s27, 1
          %s156 = scalar_lea.sflag [#allocation4], %s155
          %s157 = sand.u32 %s27, 1
          %s158 = smul.addr %s157, 128
          %s159 = scalar_lea.vmem [#allocation3], %s158
          %s161 = ssub.s32 2048, 2048
          %162 = vsyncadd %s156, %s161
          %s163 = smul.addr %s17, 16
          %s164 = smul.addr %s163, 128
          %s165 = scalar_lea.hbm %s0, %s164
          %s166 = sshll.u32 %s159, 4
          %s167 = int_to_ptr.vmem [resolvable:$true] %s166
          %172 = dma.hbm_to_vmem [thread:$0]  %s165, 2048, %s167, %s156, 128, 128, 8
        $region28: #{conv_selu_sigmoid.1} parent=23 // pred_fallthru
          _
      $region24: #{conv_selu_sigmoid.1} parent=5 // pred_fallthru
        _
      %p173 = scmp.le.s32.totalorder 1, %s17
      %p174 = scmp.lt.s32.totalorder %s17, 3
      %p175 = pnand %p173, %p174
      %p176 = pneg %p175
      // Predicated region
      $region29: #{conv_selu_sigmoid.1} parent=5 // pred_check
        _
      $region30: #{conv_selu_sigmoid.1} parent=5 // pred_check_branch
        %178 = sbr.rel (%p175) target = $region32
      $region31: #{conv_selu_sigmoid.1} parent=5 // pred_region
        %s179 = ssub.s32 %s17, 1
        %s180 = sand.u32 %s30, 1
        %s181 = scalar_lea.sflag [#allocation4], %s180
        %s182 = sand.u32 %s30, 1
        %s183 = smul.addr %s182, 128
        %s184 = scalar_lea.vmem [#allocation3], %s183
        // Predicated region
        $region33: #{conv_selu_sigmoid.1} parent=31 // pred_check
          %p185 = pneg %p43
        $region34: #{conv_selu_sigmoid.1} parent=31 // pred_check_branch
          %187 = sbr.rel (%p185) target = $region36
        $region35: #{conv_selu_sigmoid.1} parent=31 // pred_region
          %188 = dma.done %s181, 2048
        $region36: #{conv_selu_sigmoid.1} parent=31 // pred_fallthru
          _
        // Predicated region
        $region37: #{conv_selu_sigmoid.1} parent=31 // pred_check
          %p189 = pneg %p64
        $region38: #{conv_selu_sigmoid.1} parent=31 // pred_check_branch
          %191 = sbr.rel (%p189) target = $region40
        $region39: #{conv_selu_sigmoid.1} parent=31 // pred_region
          %192 = dma.done [#allocation6], 16
        $region40: #{conv_selu_sigmoid.1} parent=31 // pred_fallthru
          _
        // Predicated region
        $region41: #{conv_selu_sigmoid.1} parent=31 // pred_check
          %p193 = pneg %p85
        $region42: #{conv_selu_sigmoid.1} parent=31 // pred_check_branch
          %195 = sbr.rel (%p193) target = $region44
        $region43: #{conv_selu_sigmoid.1} parent=31 // pred_region
          %196 = dma.done [#allocation9], 16
        $region44: #{conv_selu_sigmoid.1} parent=31 // pred_fallthru
          _
        %197 = sfence
        %s198 = sand.u32 %s30, 1
        %s199 = scalar_lea.sflag [#allocation4], %s198
        %s200 = sand.u32 %s30, 1
        %s201 = smul.addr %s200, 128
        %s202 = scalar_lea.vmem [#allocation3], %s201
        %p203 = pneg %p43
        %p204 = pneg %p40
        %p205 = pneg %p64
        %p206 = pneg %p61
        %p207 = pneg %p85
        %p208 = pneg %p82
        %p209 = pneg %p111
        %p210 = pneg %p108
        %s211 = sand.u32 %s98, 1
        %s212 = scalar_lea.sflag [#allocation5], %s211
        %s213 = sand.u32 %s98, 1
        %s214 = smul.addr %s213, 64
        %s215 = scalar_lea.vmem [#allocation10], %s214
        %vm216 = vcmask 277504
        %217 = vst.msk [vmem:[#allocation2] sm:$0xff] %vm216, 0.0
        %218 = vst.msk [vmem:[#allocation2 + $0x8] sm:$0xff] %vm216, 0.0
        %219 = vst.msk [vmem:[#allocation2 + $0x10] sm:$0xff] %vm216, 0.0
        %220 = vst.msk [vmem:[#allocation2 + $0x18] sm:$0xff] %vm216, 0.0
        %vm221 = vcmask 271360
        %222 = vst.msk [vmem:[#allocation2 + $0x20] sm:$0x3] %vm221, 0.0
        %223 = vst.msk [vmem:[#allocation2 + $0x28] sm:$0xff] %vm216, 0.0
        %224 = vst.msk [vmem:[#allocation2 + $0x30] sm:$0xff] %vm216, 0.0
        %225 = vst.msk [vmem:[#allocation2 + $0x38] sm:$0xff] %vm216, 0.0
        %226 = vst.msk [vmem:[#allocation2 + $0x40] sm:$0xff] %vm216, 0.0
        %227 = vst.msk [vmem:[#allocation2 + $0x48] sm:$0x3] %vm221, 0.0
        %228 = vst.msk [vmem:[#allocation2 + $0x50] sm:$0xff] %vm216, 0.0
        %229 = vst.msk [vmem:[#allocation2 + $0x58] sm:$0xff] %vm216, 0.0
        %230 = vst.msk [vmem:[#allocation2 + $0x60] sm:$0xff] %vm216, 0.0
        %231 = vst.msk [vmem:[#allocation2 + $0x68] sm:$0xff] %vm216, 0.0
        %232 = vst.msk [vmem:[#allocation2 + $0x70] sm:$0x3] %vm221, 0.0
        %233 = vst.msk [vmem:[#allocation2 + $0x78] sm:$0xff] %vm216, 0.0
        %234 = vst.msk [vmem:[#allocation2 + $0x80] sm:$0xff] %vm216, 0.0
        %235 = vst.msk [vmem:[#allocation2 + $0x88] sm:$0xff] %vm216, 0.0
        %236 = vst.msk [vmem:[#allocation2 + $0x90] sm:$0xff] %vm216, 0.0
        %237 = vst.msk [vmem:[#allocation2 + $0x98] sm:$0x3] %vm221, 0.0
        %v238 = vld [vmem:[%s184] sm:$0xff]
        %v239 = vld [vmem:[%s184 + $0x8] sm:$0xff]
        %v240 = vld [vmem:[%s184 + $0x10] sm:$0xff]
        %v241 = vld [vmem:[%s184 + $0x18] sm:$0xff]
        %v242 = vld [vmem:[%s184 + $0x20] sm:$0xff]
        %v243 = vld [vmem:[%s184 + $0x28] sm:$0xff]
        %v244 = vld [vmem:[%s184 + $0x30] sm:$0xff]
        %v245 = vld [vmem:[%s184 + $0x38] sm:$0xff]
        %v246 = vld [vmem:[%s184 + $0x40] sm:$0xff]
        %v247 = vld [vmem:[%s184 + $0x48] sm:$0xff]
        %v248 = vld [vmem:[%s184 + $0x50] sm:$0xff]
        %v249 = vld [vmem:[%s184 + $0x58] sm:$0xff]
        %v250 = vld [vmem:[%s184 + $0x60] sm:$0xff]
        %v251 = vld [vmem:[%s184 + $0x68] sm:$0xff]
        %v252 = vld [vmem:[%s184 + $0x70] sm:$0xff]
        %v253 = vld [vmem:[%s184 + $0x78] sm:$0xff]
        %270 = vrot.lane.b32.xlu0 %v238, 1
        %v271 = vpop.permute.xlu0 %270
        %272 = vrot.lane.b32.xlu0 %v239, 1
        %v273 = vpop.permute.xlu0 %272
        %274 = vrot.lane.b32.xlu0 %v240, 1
        %v275 = vpop.permute.xlu0 %274
        %276 = vrot.lane.b32.xlu0 %v241, 1
        %v277 = vpop.permute.xlu0 %276
        %278 = vrot.lane.b32.xlu0 %v242, 1
        %v279 = vpop.permute.xlu0 %278
        %280 = vrot.lane.b32.xlu0 %v243, 1
        %v281 = vpop.permute.xlu0 %280
        %282 = vrot.lane.b32.xlu0 %v244, 1
        %v283 = vpop.permute.xlu0 %282
        %284 = vrot.lane.b32.xlu0 %v245, 1
        %v285 = vpop.permute.xlu0 %284
        %286 = vrot.lane.b32.xlu0 %v246, 1
        %v287 = vpop.permute.xlu0 %286
        %288 = vrot.lane.b32.xlu0 %v247, 1
        %v289 = vpop.permute.xlu0 %288
        %290 = vrot.lane.b32.xlu0 %v248, 1
        %v291 = vpop.permute.xlu0 %290
        %292 = vrot.lane.b32.xlu0 %v249, 1
        %v293 = vpop.permute.xlu0 %292
        %294 = vrot.lane.b32.xlu0 %v250, 1
        %v295 = vpop.permute.xlu0 %294
        %296 = vrot.lane.b32.xlu0 %v251, 1
        %v297 = vpop.permute.xlu0 %296
        %298 = vrot.lane.b32.xlu0 %v252, 1
        %v299 = vpop.permute.xlu0 %298
        %300 = vrot.lane.b32.xlu0 %v253, 1
        %v301 = vpop.permute.xlu0 %300
        %vm318 = vcmask 269320
        %319 = vst.msk [vmem:[#allocation2 + $0x1] sm:$0xff] %vm318, %v271
        %320 = vst.msk [vmem:[#allocation2 + $0x9] sm:$0xff] %vm318, %v273
        %321 = vst.msk [vmem:[#allocation2 + $0x11] sm:$0xff] %vm318, %v275
        %322 = vst.msk [vmem:[#allocation2 + $0x19] sm:$0xff] %vm318, %v277
        %323 = vst.msk [vmem:[#allocation2 + $0x29] sm:$0xff] %vm318, %v279
        %324 = vst.msk [vmem:[#allocation2 + $0x31] sm:$0xff] %vm318, %v281
        %325 = vst.msk [vmem:[#allocation2 + $0x39] sm:$0xff] %vm318, %v283
        %326 = vst.msk [vmem:[#allocation2 + $0x41] sm:$0xff] %vm318, %v285
        %327 = vst.msk [vmem:[#allocation2 + $0x51] sm:$0xff] %vm318, %v287
        %328 = vst.msk [vmem:[#allocation2 + $0x59] sm:$0xff] %vm318, %v289
        %329 = vst.msk [vmem:[#allocation2 + $0x61] sm:$0xff] %vm318, %v291
        %330 = vst.msk [vmem:[#allocation2 + $0x69] sm:$0xff] %vm318, %v293
        %331 = vst.msk [vmem:[#allocation2 + $0x79] sm:$0xff] %vm318, %v295
        %332 = vst.msk [vmem:[#allocation2 + $0x81] sm:$0xff] %vm318, %v297
        %333 = vst.msk [vmem:[#allocation2 + $0x89] sm:$0xff] %vm318, %v299
        %334 = vst.msk [vmem:[#allocation2 + $0x91] sm:$0xff] %vm318, %v301
        %v335 = vld [vmem:[#allocation2] sm:$0xff]
        %v336 = vld [vmem:[#allocation2 + $0x8] sm:$0xff]
        %v337 = vld [vmem:[#allocation2 + $0x10] sm:$0xff]
        %v338 = vld [vmem:[#allocation2 + $0x18] sm:$0xff]
        %s339 = sld [smem:[#allocation7]]
        %v340 = vstv %s339
        %v341 = vmul.f32 %v340, %v335
        %v342 = vmul.f32 %v340, %v336
        %v343 = vmul.f32 %v340, %v337
        %v344 = vmul.f32 %v340, %v338
        %v345 = vadd.f32 %v341, 0.0
        %v346 = vadd.f32 %v342, 0.0
        %v347 = vadd.f32 %v343, 0.0
        %v348 = vadd.f32 %v344, 0.0
        %s349 = sld [smem:[#allocation7 + $0x24]]
        %v350 = vstv %s349
        %v351 = vmul.f32 %v350, %v335
        %v352 = vmul.f32 %v350, %v336
        %v353 = vmul.f32 %v350, %v337
        %v354 = vmul.f32 %v350, %v338
        %v355 = vadd.f32 %v351, 0.0
        %v356 = vadd.f32 %v352, 0.0
        %v357 = vadd.f32 %v353, 0.0
        %v358 = vadd.f32 %v354, 0.0
        %s359 = sld [smem:[#allocation7 + $0x1]]
        %v360 = vstv %s359
        %v361 = vmul.f32 %v360, %v335
        %v362 = vmul.f32 %v360, %v336
        %v363 = vmul.f32 %v360, %v337
        %v364 = vmul.f32 %v360, %v338
        %369 = vrot.lane.b32.xlu0 %v361, 127
        %v370 = vpop.permute.xlu0 %369
        %371 = vrot.lane.b32.xlu0 %v362, 127
        %v372 = vpop.permute.xlu0 %371
        %373 = vrot.lane.b32.xlu0 %v363, 127
        %v374 = vpop.permute.xlu0 %373
        %375 = vrot.lane.b32.xlu0 %v364, 127
        %v376 = vpop.permute.xlu0 %375
        %v381 = vadd.f32 %v345, %v370
        %v382 = vadd.f32 %v346, %v372
        %v383 = vadd.f32 %v347, %v374
        %v384 = vadd.f32 %v348, %v376
        %s385 = sld [smem:[#allocation7 + $0x25]]
        %v386 = vstv %s385
        %v387 = vmul.f32 %v386, %v335
        %v388 = vmul.f32 %v386, %v336
        %v389 = vmul.f32 %v386, %v337
        %v390 = vmul.f32 %v386, %v338
        %395 = vrot.lane.b32.xlu0 %v387, 127
        %v396 = vpop.permute.xlu0 %395
        %397 = vrot.lane.b32.xlu0 %v388, 127
        %v398 = vpop.permute.xlu0 %397
        %399 = vrot.lane.b32.xlu0 %v389, 127
        %v400 = vpop.permute.xlu0 %399
        %401 = vrot.lane.b32.xlu0 %v390, 127
        %v402 = vpop.permute.xlu0 %401
        %v407 = vadd.f32 %v355, %v396
        %v408 = vadd.f32 %v356, %v398
        %v409 = vadd.f32 %v357, %v400
        %v410 = vadd.f32 %v358, %v402
        %s411 = sld [smem:[#allocation7 + $0x2]]
        %v412 = vstv %s411
        %v413 = vmul.f32 %v412, %v335
        %v414 = vmul.f32 %v412, %v336
        %v415 = vmul.f32 %v412, %v337
        %v416 = vmul.f32 %v412, %v338
        %421 = vrot.lane.b32.xlu0 %v413, 126
        %v422 = vpop.permute.xlu0 %421
        %423 = vrot.lane.b32.xlu0 %v414, 126
        %v424 = vpop.permute.xlu0 %423
        %425 = vrot.lane.b32.xlu0 %v415, 126
        %v426 = vpop.permute.xlu0 %425
        %427 = vrot.lane.b32.xlu0 %v416, 126
        %v428 = vpop.permute.xlu0 %427
        %v433 = vadd.f32 %v381, %v422
        %v434 = vadd.f32 %v382, %v424
        %v435 = vadd.f32 %v383, %v426
        %v436 = vadd.f32 %v384, %v428
        %s437 = sld [smem:[#allocation7 + $0x26]]
        %v438 = vstv %s437
        %v439 = vmul.f32 %v438, %v335
        %v440 = vmul.f32 %v438, %v336
        %v441 = vmul.f32 %v438, %v337
        %v442 = vmul.f32 %v438, %v338
        %447 = vrot.lane.b32.xlu0 %v439, 126
        %v448 = vpop.permute.xlu0 %447
        %449 = vrot.lane.b32.xlu0 %v440, 126
        %v450 = vpop.permute.xlu0 %449
        %451 = vrot.lane.b32.xlu0 %v441, 126
        %v452 = vpop.permute.xlu0 %451
        %453 = vrot.lane.b32.xlu0 %v442, 126
        %v454 = vpop.permute.xlu0 %453
        %v459 = vadd.f32 %v407, %v448
        %v460 = vadd.f32 %v408, %v450
        %v461 = vadd.f32 %v409, %v452
        %v462 = vadd.f32 %v410, %v454
        %v463 = vld [vmem:[#allocation2 + $0x1] sm:$0xff]
        %v464 = vld [vmem:[#allocation2 + $0x9] sm:$0xff]
        %v465 = vld [vmem:[#allocation2 + $0x11] sm:$0xff]
        %v466 = vld [vmem:[#allocation2 + $0x19] sm:$0xff]
        %s467 = sld [smem:[#allocation7 + $0x3]]
        %v468 = vstv %s467
        %v469 = vmul.f32 %v468, %v463
        %v470 = vmul.f32 %v468, %v464
        %v471 = vmul.f32 %v468, %v465
        %v472 = vmul.f32 %v468, %v466
        %v473 = vadd.f32 %v433, %v469
        %v474 = vadd.f32 %v434, %v470
        %v475 = vadd.f32 %v435, %v471
        %v476 = vadd.f32 %v436, %v472
        %s477 = sld [smem:[#allocation7 + $0x27]]
        %v478 = vstv %s477
        %v479 = vmul.f32 %v478, %v463
        %v480 = vmul.f32 %v478, %v464
        %v481 = vmul.f32 %v478, %v465
        %v482 = vmul.f32 %v478, %v466
        %v483 = vadd.f32 %v459, %v479
        %v484 = vadd.f32 %v460, %v480
        %v485 = vadd.f32 %v461, %v481
        %v486 = vadd.f32 %v462, %v482
        %s487 = sld [smem:[#allocation7 + $0x4]]
        %v488 = vstv %s487
        %v489 = vmul.f32 %v488, %v463
        %v490 = vmul.f32 %v488, %v464
        %v491 = vmul.f32 %v488, %v465
        %v492 = vmul.f32 %v488, %v466
        %497 = vrot.lane.b32.xlu0 %v489, 127
        %v498 = vpop.permute.xlu0 %497
        %499 = vrot.lane.b32.xlu0 %v490, 127
        %v500 = vpop.permute.xlu0 %499
        %501 = vrot.lane.b32.xlu0 %v491, 127
        %v502 = vpop.permute.xlu0 %501
        %503 = vrot.lane.b32.xlu0 %v492, 127
        %v504 = vpop.permute.xlu0 %503
        %v509 = vadd.f32 %v473, %v498
        %v510 = vadd.f32 %v474, %v500
        %v511 = vadd.f32 %v475, %v502
        %v512 = vadd.f32 %v476, %v504
        %s513 = sld [smem:[#allocation7 + $0x28]]
        %v514 = vstv %s513
        %v515 = vmul.f32 %v514, %v463
        %v516 = vmul.f32 %v514, %v464
        %v517 = vmul.f32 %v514, %v465
        %v518 = vmul.f32 %v514, %v466
        %523 = vrot.lane.b32.xlu0 %v515, 127
        %v524 = vpop.permute.xlu0 %523
        %525 = vrot.lane.b32.xlu0 %v516, 127
        %v526 = vpop.permute.xlu0 %525
        %527 = vrot.lane.b32.xlu0 %v517, 127
        %v528 = vpop.permute.xlu0 %527
        %529 = vrot.lane.b32.xlu0 %v518, 127
        %v530 = vpop.permute.xlu0 %529
        %v535 = vadd.f32 %v483, %v524
        %v536 = vadd.f32 %v484, %v526
        %v537 = vadd.f32 %v485, %v528
        %v538 = vadd.f32 %v486, %v530
        %s539 = sld [smem:[#allocation7 + $0x5]]
        %v540 = vstv %s539
        %v541 = vmul.f32 %v540, %v463
        %v542 = vmul.f32 %v540, %v464
        %v543 = vmul.f32 %v540, %v465
        %v544 = vmul.f32 %v540, %v466
        %549 = vrot.lane.b32.xlu0 %v541, 126
        %v550 = vpop.permute.xlu0 %549
        %551 = vrot.lane.b32.xlu0 %v542, 126
        %v552 = vpop.permute.xlu0 %551
        %553 = vrot.lane.b32.xlu0 %v543, 126
        %v554 = vpop.permute.xlu0 %553
        %555 = vrot.lane.b32.xlu0 %v544, 126
        %v556 = vpop.permute.xlu0 %555
        %v561 = vadd.f32 %v509, %v550
        %v562 = vadd.f32 %v510, %v552
        %v563 = vadd.f32 %v511, %v554
        %v564 = vadd.f32 %v512, %v556
        %s565 = sld [smem:[#allocation7 + $0x29]]
        %v566 = vstv %s565
        %v567 = vmul.f32 %v566, %v463
        %v568 = vmul.f32 %v566, %v464
        %v569 = vmul.f32 %v566, %v465
        %v570 = vmul.f32 %v566, %v466
        %575 = vrot.lane.b32.xlu0 %v567, 126
        %v576 = vpop.permute.xlu0 %575
        %577 = vrot.lane.b32.xlu0 %v568, 126
        %v578 = vpop.permute.xlu0 %577
        %579 = vrot.lane.b32.xlu0 %v569, 126
        %v580 = vpop.permute.xlu0 %579
        %581 = vrot.lane.b32.xlu0 %v570, 126
        %v582 = vpop.permute.xlu0 %581
        %v587 = vadd.f32 %v535, %v576
        %v588 = vadd.f32 %v536, %v578
        %v589 = vadd.f32 %v537, %v580
        %v590 = vadd.f32 %v538, %v582
        %v591 = vld [vmem:[#allocation2 + $0x2] sm:$0xff]
        %v592 = vld [vmem:[#allocation2 + $0xa] sm:$0xff]
        %v593 = vld [vmem:[#allocation2 + $0x12] sm:$0xff]
        %v594 = vld [vmem:[#allocation2 + $0x1a] sm:$0xff]
        %s595 = sld [smem:[#allocation7 + $0x6]]
        %v596 = vstv %s595
        %v597 = vmul.f32 %v596, %v591
        %v598 = vmul.f32 %v596, %v592
        %v599 = vmul.f32 %v596, %v593
        %v600 = vmul.f32 %v596, %v594
        %v601 = vadd.f32 %v561, %v597
        %v602 = vadd.f32 %v562, %v598
        %v603 = vadd.f32 %v563, %v599
        %v604 = vadd.f32 %v564, %v600
        %s605 = sld [smem:[#allocation7 + $0x2a]]
        %v606 = vstv %s605
        %v607 = vmul.f32 %v606, %v591
        %v608 = vmul.f32 %v606, %v592
        %v609 = vmul.f32 %v606, %v593
        %v610 = vmul.f32 %v606, %v594
        %v611 = vadd.f32 %v587, %v607
        %v612 = vadd.f32 %v588, %v608
        %v613 = vadd.f32 %v589, %v609
        %v614 = vadd.f32 %v590, %v610
        %s615 = sld [smem:[#allocation7 + $0x7]]
        %v616 = vstv %s615
        %v617 = vmul.f32 %v616, %v591
        %v618 = vmul.f32 %v616, %v592
        %v619 = vmul.f32 %v616, %v593
        %v620 = vmul.f32 %v616, %v594
        %625 = vrot.lane.b32.xlu0 %v617, 127
        %v626 = vpop.permute.xlu0 %625
        %627 = vrot.lane.b32.xlu0 %v618, 127
        %v628 = vpop.permute.xlu0 %627
        %629 = vrot.lane.b32.xlu0 %v619, 127
        %v630 = vpop.permute.xlu0 %629
        %631 = vrot.lane.b32.xlu0 %v620, 127
        %v632 = vpop.permute.xlu0 %631
        %v637 = vadd.f32 %v601, %v626
        %v638 = vadd.f32 %v602, %v628
        %v639 = vadd.f32 %v603, %v630
        %v640 = vadd.f32 %v604, %v632
        %s641 = sld [smem:[#allocation7 + $0x2b]]
        %v642 = vstv %s641
        %v643 = vmul.f32 %v642, %v591
        %v644 = vmul.f32 %v642, %v592
        %v645 = vmul.f32 %v642, %v593
        %v646 = vmul.f32 %v642, %v594
        %651 = vrot.lane.b32.xlu0 %v643, 127
        %v652 = vpop.permute.xlu0 %651
        %653 = vrot.lane.b32.xlu0 %v644, 127
        %v654 = vpop.permute.xlu0 %653
        %655 = vrot.lane.b32.xlu0 %v645, 127
        %v656 = vpop.permute.xlu0 %655
        %657 = vrot.lane.b32.xlu0 %v646, 127
        %v658 = vpop.permute.xlu0 %657
        %v663 = vadd.f32 %v611, %v652
        %v664 = vadd.f32 %v612, %v654
        %v665 = vadd.f32 %v613, %v656
        %v666 = vadd.f32 %v614, %v658
        %s667 = sld [smem:[#allocation7 + $0x8]]
        %v668 = vstv %s667
        %v669 = vmul.f32 %v668, %v591
        %v670 = vmul.f32 %v668, %v592
        %v671 = vmul.f32 %v668, %v593
        %v672 = vmul.f32 %v668, %v594
        %677 = vrot.lane.b32.xlu0 %v669, 126
        %v678 = vpop.permute.xlu0 %677
        %679 = vrot.lane.b32.xlu0 %v670, 126
        %v680 = vpop.permute.xlu0 %679
        %681 = vrot.lane.b32.xlu0 %v671, 126
        %v682 = vpop.permute.xlu0 %681
        %683 = vrot.lane.b32.xlu0 %v672, 126
        %v684 = vpop.permute.xlu0 %683
        %v689 = vadd.f32 %v637, %v678
        %v690 = vadd.f32 %v638, %v680
        %v691 = vadd.f32 %v639, %v682
        %v692 = vadd.f32 %v640, %v684
        %s693 = sld [smem:[#allocation7 + $0x2c]]
        %v694 = vstv %s693
        %v695 = vmul.f32 %v694, %v591
        %v696 = vmul.f32 %v694, %v592
        %v697 = vmul.f32 %v694, %v593
        %v698 = vmul.f32 %v694, %v594
        %703 = vrot.lane.b32.xlu0 %v695, 126
        %v704 = vpop.permute.xlu0 %703
        %705 = vrot.lane.b32.xlu0 %v696, 126
        %v706 = vpop.permute.xlu0 %705
        %707 = vrot.lane.b32.xlu0 %v697, 126
        %v708 = vpop.permute.xlu0 %707
        %709 = vrot.lane.b32.xlu0 %v698, 126
        %v710 = vpop.permute.xlu0 %709
        %v715 = vadd.f32 %v663, %v704
        %v716 = vadd.f32 %v664, %v706
        %v717 = vadd.f32 %v665, %v708
        %v718 = vadd.f32 %v666, %v710
        %s719 = scalar_lea.vmem [#allocation2], 40
        %v720 = vld [vmem:[%s719] sm:$0xff]
        %v721 = vld [vmem:[%s719 + $0x8] sm:$0xff]
        %v722 = vld [vmem:[%s719 + $0x10] sm:$0xff]
        %v723 = vld [vmem:[%s719 + $0x18] sm:$0xff]
        %s724 = sld [smem:[#allocation7 + $0x9]]
        %v725 = vstv %s724
        %v726 = vmul.f32 %v725, %v720
        %v727 = vmul.f32 %v725, %v721
        %v728 = vmul.f32 %v725, %v722
        %v729 = vmul.f32 %v725, %v723
        %v730 = vadd.f32 %v689, %v726
        %v731 = vadd.f32 %v690, %v727
        %v732 = vadd.f32 %v691, %v728
        %v733 = vadd.f32 %v692, %v729
        %s734 = sld [smem:[#allocation7 + $0x2d]]
        %v735 = vstv %s734
        %v736 = vmul.f32 %v735, %v720
        %v737 = vmul.f32 %v735, %v721
        %v738 = vmul.f32 %v735, %v722
        %v739 = vmul.f32 %v735, %v723
        %v740 = vadd.f32 %v715, %v736
        %v741 = vadd.f32 %v716, %v737
        %v742 = vadd.f32 %v717, %v738
        %v743 = vadd.f32 %v718, %v739
        %s744 = sld [smem:[#allocation7 + $0xa]]
        %v745 = vstv %s744
        %v746 = vmul.f32 %v745, %v720
        %v747 = vmul.f32 %v745, %v721
        %v748 = vmul.f32 %v745, %v722
        %v749 = vmul.f32 %v745, %v723
        %754 = vrot.lane.b32.xlu0 %v746, 127
        %v755 = vpop.permute.xlu0 %754
        %756 = vrot.lane.b32.xlu0 %v747, 127
        %v757 = vpop.permute.xlu0 %756
        %758 = vrot.lane.b32.xlu0 %v748, 127
        %v759 = vpop.permute.xlu0 %758
        %760 = vrot.lane.b32.xlu0 %v749, 127
        %v761 = vpop.permute.xlu0 %760
        %v766 = vadd.f32 %v730, %v755
        %v767 = vadd.f32 %v731, %v757
        %v768 = vadd.f32 %v732, %v759
        %v769 = vadd.f32 %v733, %v761
        %s770 = sld [smem:[#allocation7 + $0x2e]]
        %v771 = vstv %s770
        %v772 = vmul.f32 %v771, %v720
        %v773 = vmul.f32 %v771, %v721
        %v774 = vmul.f32 %v771, %v722
        %v775 = vmul.f32 %v771, %v723
        %780 = vrot.lane.b32.xlu0 %v772, 127
        %v781 = vpop.permute.xlu0 %780
        %782 = vrot.lane.b32.xlu0 %v773, 127
        %v783 = vpop.permute.xlu0 %782
        %784 = vrot.lane.b32.xlu0 %v774, 127
        %v785 = vpop.permute.xlu0 %784
        %786 = vrot.lane.b32.xlu0 %v775, 127
        %v787 = vpop.permute.xlu0 %786
        %v792 = vadd.f32 %v740, %v781
        %v793 = vadd.f32 %v741, %v783
        %v794 = vadd.f32 %v742, %v785
        %v795 = vadd.f32 %v743, %v787
        %s796 = sld [smem:[#allocation7 + $0xb]]
        %v797 = vstv %s796
        %v798 = vmul.f32 %v797, %v720
        %v799 = vmul.f32 %v797, %v721
        %v800 = vmul.f32 %v797, %v722
        %v801 = vmul.f32 %v797, %v723
        %806 = vrot.lane.b32.xlu0 %v798, 126
        %v807 = vpop.permute.xlu0 %806
        %808 = vrot.lane.b32.xlu0 %v799, 126
        %v809 = vpop.permute.xlu0 %808
        %810 = vrot.lane.b32.xlu0 %v800, 126
        %v811 = vpop.permute.xlu0 %810
        %812 = vrot.lane.b32.xlu0 %v801, 126
        %v813 = vpop.permute.xlu0 %812
        %v818 = vadd.f32 %v766, %v807
        %v819 = vadd.f32 %v767, %v809
        %v820 = vadd.f32 %v768, %v811
        %v821 = vadd.f32 %v769, %v813
        %s822 = sld [smem:[#allocation7 + $0x2f]]
        %v823 = vstv %s822
        %v824 = vmul.f32 %v823, %v720
        %v825 = vmul.f32 %v823, %v721
        %v826 = vmul.f32 %v823, %v722
        %v827 = vmul.f32 %v823, %v723
        %832 = vrot.lane.b32.xlu0 %v824, 126
        %v833 = vpop.permute.xlu0 %832
        %834 = vrot.lane.b32.xlu0 %v825, 126
        %v835 = vpop.permute.xlu0 %834
        %836 = vrot.lane.b32.xlu0 %v826, 126
        %v837 = vpop.permute.xlu0 %836
        %838 = vrot.lane.b32.xlu0 %v827, 126
        %v839 = vpop.permute.xlu0 %838
        %v844 = vadd.f32 %v792, %v833
        %v845 = vadd.f32 %v793, %v835
        %v846 = vadd.f32 %v794, %v837
        %v847 = vadd.f32 %v795, %v839
        %v848 = vld [vmem:[%s719 + $0x1] sm:$0xff]
        %v849 = vld [vmem:[%s719 + $0x9] sm:$0xff]
        %v850 = vld [vmem:[%s719 + $0x11] sm:$0xff]
        %v851 = vld [vmem:[%s719 + $0x19] sm:$0xff]
        %s852 = sld [smem:[#allocation7 + $0xc]]
        %v853 = vstv %s852
        %v854 = vmul.f32 %v853, %v848
        %v855 = vmul.f32 %v853, %v849
        %v856 = vmul.f32 %v853, %v850
        %v857 = vmul.f32 %v853, %v851
        %v858 = vadd.f32 %v818, %v854
        %v859 = vadd.f32 %v819, %v855
        %v860 = vadd.f32 %v820, %v856
        %v861 = vadd.f32 %v821, %v857
        %s862 = sld [smem:[#allocation7 + $0x30]]
        %v863 = vstv %s862
        %v864 = vmul.f32 %v863, %v848
        %v865 = vmul.f32 %v863, %v849
        %v866 = vmul.f32 %v863, %v850
        %v867 = vmul.f32 %v863, %v851
        %v868 = vadd.f32 %v844, %v864
        %v869 = vadd.f32 %v845, %v865
        %v870 = vadd.f32 %v846, %v866
        %v871 = vadd.f32 %v847, %v867
        %s872 = sld [smem:[#allocation7 + $0xd]]
        %v873 = vstv %s872
        %v874 = vmul.f32 %v873, %v848
        %v875 = vmul.f32 %v873, %v849
        %v876 = vmul.f32 %v873, %v850
        %v877 = vmul.f32 %v873, %v851
        %882 = vrot.lane.b32.xlu0 %v874, 127
        %v883 = vpop.permute.xlu0 %882
        %884 = vrot.lane.b32.xlu0 %v875, 127
        %v885 = vpop.permute.xlu0 %884
        %886 = vrot.lane.b32.xlu0 %v876, 127
        %v887 = vpop.permute.xlu0 %886
        %888 = vrot.lane.b32.xlu0 %v877, 127
        %v889 = vpop.permute.xlu0 %888
        %v894 = vadd.f32 %v858, %v883
        %v895 = vadd.f32 %v859, %v885
        %v896 = vadd.f32 %v860, %v887
        %v897 = vadd.f32 %v861, %v889
        %s898 = sld [smem:[#allocation7 + $0x31]]
        %v899 = vstv %s898
        %v900 = vmul.f32 %v899, %v848
        %v901 = vmul.f32 %v899, %v849
        %v902 = vmul.f32 %v899, %v850
        %v903 = vmul.f32 %v899, %v851
        %908 = vrot.lane.b32.xlu0 %v900, 127
        %v909 = vpop.permute.xlu0 %908
        %910 = vrot.lane.b32.xlu0 %v901, 127
        %v911 = vpop.permute.xlu0 %910
        %912 = vrot.lane.b32.xlu0 %v902, 127
        %v913 = vpop.permute.xlu0 %912
        %914 = vrot.lane.b32.xlu0 %v903, 127
        %v915 = vpop.permute.xlu0 %914
        %v920 = vadd.f32 %v868, %v909
        %v921 = vadd.f32 %v869, %v911
        %v922 = vadd.f32 %v870, %v913
        %v923 = vadd.f32 %v871, %v915
        %s924 = sld [smem:[#allocation7 + $0xe]]
        %v925 = vstv %s924
        %v926 = vmul.f32 %v925, %v848
        %v927 = vmul.f32 %v925, %v849
        %v928 = vmul.f32 %v925, %v850
        %v929 = vmul.f32 %v925, %v851
        %934 = vrot.lane.b32.xlu0 %v926, 126
        %v935 = vpop.permute.xlu0 %934
        %936 = vrot.lane.b32.xlu0 %v927, 126
        %v937 = vpop.permute.xlu0 %936
        %938 = vrot.lane.b32.xlu0 %v928, 126
        %v939 = vpop.permute.xlu0 %938
        %940 = vrot.lane.b32.xlu0 %v929, 126
        %v941 = vpop.permute.xlu0 %940
        %v946 = vadd.f32 %v894, %v935
        %v947 = vadd.f32 %v895, %v937
        %v948 = vadd.f32 %v896, %v939
        %v949 = vadd.f32 %v897, %v941
        %s950 = sld [smem:[#allocation7 + $0x32]]
        %v951 = vstv %s950
        %v952 = vmul.f32 %v951, %v848
        %v953 = vmul.f32 %v951, %v849
        %v954 = vmul.f32 %v951, %v850
        %v955 = vmul.f32 %v951, %v851
        %960 = vrot.lane.b32.xlu0 %v952, 126
        %v961 = vpop.permute.xlu0 %960
        %962 = vrot.lane.b32.xlu0 %v953, 126
        %v963 = vpop.permute.xlu0 %962
        %964 = vrot.lane.b32.xlu0 %v954, 126
        %v965 = vpop.permute.xlu0 %964
        %966 = vrot.lane.b32.xlu0 %v955, 126
        %v967 = vpop.permute.xlu0 %966
        %v972 = vadd.f32 %v920, %v961
        %v973 = vadd.f32 %v921, %v963
        %v974 = vadd.f32 %v922, %v965
        %v975 = vadd.f32 %v923, %v967
        %v976 = vld [vmem:[%s719 + $0x2] sm:$0xff]
        %v977 = vld [vmem:[%s719 + $0xa] sm:$0xff]
        %v978 = vld [vmem:[%s719 + $0x12] sm:$0xff]
        %v979 = vld [vmem:[%s719 + $0x1a] sm:$0xff]
        %s980 = sld [smem:[#allocation7 + $0xf]]
        %v981 = vstv %s980
        %v982 = vmul.f32 %v981, %v976
        %v983 = vmul.f32 %v981, %v977
        %v984 = vmul.f32 %v981, %v978
        %v985 = vmul.f32 %v981, %v979
        %v986 = vadd.f32 %v946, %v982
        %v987 = vadd.f32 %v947, %v983
        %v988 = vadd.f32 %v948, %v984
        %v989 = vadd.f32 %v949, %v985
        %s990 = sld [smem:[#allocation7 + $0x33]]
        %v991 = vstv %s990
        %v992 = vmul.f32 %v991, %v976
        %v993 = vmul.f32 %v991, %v977
        %v994 = vmul.f32 %v991, %v978
        %v995 = vmul.f32 %v991, %v979
        %v996 = vadd.f32 %v972, %v992
        %v997 = vadd.f32 %v973, %v993
        %v998 = vadd.f32 %v974, %v994
        %v999 = vadd.f32 %v975, %v995
        %s1000 = sld [smem:[#allocation7 + $0x10]]
        %v1001 = vstv %s1000
        %v1002 = vmul.f32 %v1001, %v976
        %v1003 = vmul.f32 %v1001, %v977
        %v1004 = vmul.f32 %v1001, %v978
        %v1005 = vmul.f32 %v1001, %v979
        %1010 = vrot.lane.b32.xlu0 %v1002, 127
        %v1011 = vpop.permute.xlu0 %1010
        %1012 = vrot.lane.b32.xlu0 %v1003, 127
        %v1013 = vpop.permute.xlu0 %1012
        %1014 = vrot.lane.b32.xlu0 %v1004, 127
        %v1015 = vpop.permute.xlu0 %1014
        %1016 = vrot.lane.b32.xlu0 %v1005, 127
        %v1017 = vpop.permute.xlu0 %1016
        %v1022 = vadd.f32 %v986, %v1011
        %v1023 = vadd.f32 %v987, %v1013
        %v1024 = vadd.f32 %v988, %v1015
        %v1025 = vadd.f32 %v989, %v1017
        %s1026 = sld [smem:[#allocation7 + $0x34]]
        %v1027 = vstv %s1026
        %v1028 = vmul.f32 %v1027, %v976
        %v1029 = vmul.f32 %v1027, %v977
        %v1030 = vmul.f32 %v1027, %v978
        %v1031 = vmul.f32 %v1027, %v979
        %1036 = vrot.lane.b32.xlu0 %v1028, 127
        %v1037 = vpop.permute.xlu0 %1036
        %1038 = vrot.lane.b32.xlu0 %v1029, 127
        %v1039 = vpop.permute.xlu0 %1038
        %1040 = vrot.lane.b32.xlu0 %v1030, 127
        %v1041 = vpop.permute.xlu0 %1040
        %1042 = vrot.lane.b32.xlu0 %v1031, 127
        %v1043 = vpop.permute.xlu0 %1042
        %v1048 = vadd.f32 %v996, %v1037
        %v1049 = vadd.f32 %v997, %v1039
        %v1050 = vadd.f32 %v998, %v1041
        %v1051 = vadd.f32 %v999, %v1043
        %s1052 = sld [smem:[#allocation7 + $0x11]]
        %v1053 = vstv %s1052
        %v1054 = vmul.f32 %v1053, %v976
        %v1055 = vmul.f32 %v1053, %v977
        %v1056 = vmul.f32 %v1053, %v978
        %v1057 = vmul.f32 %v1053, %v979
        %1062 = vrot.lane.b32.xlu0 %v1054, 126
        %v1063 = vpop.permute.xlu0 %1062
        %1064 = vrot.lane.b32.xlu0 %v1055, 126
        %v1065 = vpop.permute.xlu0 %1064
        %1066 = vrot.lane.b32.xlu0 %v1056, 126
        %v1067 = vpop.permute.xlu0 %1066
        %1068 = vrot.lane.b32.xlu0 %v1057, 126
        %v1069 = vpop.permute.xlu0 %1068
        %v1074 = vadd.f32 %v1022, %v1063
        %v1075 = vadd.f32 %v1023, %v1065
        %v1076 = vadd.f32 %v1024, %v1067
        %v1077 = vadd.f32 %v1025, %v1069
        %s1078 = sld [smem:[#allocation7 + $0x35]]
        %v1079 = vstv %s1078
        %v1080 = vmul.f32 %v1079, %v976
        %v1081 = vmul.f32 %v1079, %v977
        %v1082 = vmul.f32 %v1079, %v978
        %v1083 = vmul.f32 %v1079, %v979
        %1088 = vrot.lane.b32.xlu0 %v1080, 126
        %v1089 = vpop.permute.xlu0 %1088
        %1090 = vrot.lane.b32.xlu0 %v1081, 126
        %v1091 = vpop.permute.xlu0 %1090
        %1092 = vrot.lane.b32.xlu0 %v1082, 126
        %v1093 = vpop.permute.xlu0 %1092
        %1094 = vrot.lane.b32.xlu0 %v1083, 126
        %v1095 = vpop.permute.xlu0 %1094
        %v1100 = vadd.f32 %v1048, %v1089
        %v1101 = vadd.f32 %v1049, %v1091
        %v1102 = vadd.f32 %v1050, %v1093
        %v1103 = vadd.f32 %v1051, %v1095
        %s1104 = scalar_lea.vmem [#allocation2], 80
        %v1105 = vld [vmem:[%s1104] sm:$0xff]
        %v1106 = vld [vmem:[%s1104 + $0x8] sm:$0xff]
        %v1107 = vld [vmem:[%s1104 + $0x10] sm:$0xff]
        %v1108 = vld [vmem:[%s1104 + $0x18] sm:$0xff]
        %s1109 = sld [smem:[#allocation7 + $0x12]]
        %v1110 = vstv %s1109
        %v1111 = vmul.f32 %v1110, %v1105
        %v1112 = vmul.f32 %v1110, %v1106
        %v1113 = vmul.f32 %v1110, %v1107
        %v1114 = vmul.f32 %v1110, %v1108
        %v1115 = vadd.f32 %v1074, %v1111
        %v1116 = vadd.f32 %v1075, %v1112
        %v1117 = vadd.f32 %v1076, %v1113
        %v1118 = vadd.f32 %v1077, %v1114
        %s1119 = sld [smem:[#allocation7 + $0x36]]
        %v1120 = vstv %s1119
        %v1121 = vmul.f32 %v1120, %v1105
        %v1122 = vmul.f32 %v1120, %v1106
        %v1123 = vmul.f32 %v1120, %v1107
        %v1124 = vmul.f32 %v1120, %v1108
        %v1125 = vadd.f32 %v1100, %v1121
        %v1126 = vadd.f32 %v1101, %v1122
        %v1127 = vadd.f32 %v1102, %v1123
        %v1128 = vadd.f32 %v1103, %v1124
        %s1129 = sld [smem:[#allocation7 + $0x13]]
        %v1130 = vstv %s1129
        %v1131 = vmul.f32 %v1130, %v1105
        %v1132 = vmul.f32 %v1130, %v1106
        %v1133 = vmul.f32 %v1130, %v1107
        %v1134 = vmul.f32 %v1130, %v1108
        %1139 = vrot.lane.b32.xlu0 %v1131, 127
        %v1140 = vpop.permute.xlu0 %1139
        %1141 = vrot.lane.b32.xlu0 %v1132, 127
        %v1142 = vpop.permute.xlu0 %1141
        %1143 = vrot.lane.b32.xlu0 %v1133, 127
        %v1144 = vpop.permute.xlu0 %1143
        %1145 = vrot.lane.b32.xlu0 %v1134, 127
        %v1146 = vpop.permute.xlu0 %1145
        %v1151 = vadd.f32 %v1115, %v1140
        %v1152 = vadd.f32 %v1116, %v1142
        %v1153 = vadd.f32 %v1117, %v1144
        %v1154 = vadd.f32 %v1118, %v1146
        %s1155 = sld [smem:[#allocation7 + $0x37]]
        %v1156 = vstv %s1155
        %v1157 = vmul.f32 %v1156, %v1105
        %v1158 = vmul.f32 %v1156, %v1106
        %v1159 = vmul.f32 %v1156, %v1107
        %v1160 = vmul.f32 %v1156, %v1108
        %1165 = vrot.lane.b32.xlu0 %v1157, 127
        %v1166 = vpop.permute.xlu0 %1165
        %1167 = vrot.lane.b32.xlu0 %v1158, 127
        %v1168 = vpop.permute.xlu0 %1167
        %1169 = vrot.lane.b32.xlu0 %v1159, 127
        %v1170 = vpop.permute.xlu0 %1169
        %1171 = vrot.lane.b32.xlu0 %v1160, 127
        %v1172 = vpop.permute.xlu0 %1171
        %v1177 = vadd.f32 %v1125, %v1166
        %v1178 = vadd.f32 %v1126, %v1168
        %v1179 = vadd.f32 %v1127, %v1170
        %v1180 = vadd.f32 %v1128, %v1172
        %s1181 = sld [smem:[#allocation7 + $0x14]]
        %v1182 = vstv %s1181
        %v1183 = vmul.f32 %v1182, %v1105
        %v1184 = vmul.f32 %v1182, %v1106
        %v1185 = vmul.f32 %v1182, %v1107
        %v1186 = vmul.f32 %v1182, %v1108
        %1191 = vrot.lane.b32.xlu0 %v1183, 126
        %v1192 = vpop.permute.xlu0 %1191
        %1193 = vrot.lane.b32.xlu0 %v1184, 126
        %v1194 = vpop.permute.xlu0 %1193
        %1195 = vrot.lane.b32.xlu0 %v1185, 126
        %v1196 = vpop.permute.xlu0 %1195
        %1197 = vrot.lane.b32.xlu0 %v1186, 126
        %v1198 = vpop.permute.xlu0 %1197
        %v1203 = vadd.f32 %v1151, %v1192
        %v1204 = vadd.f32 %v1152, %v1194
        %v1205 = vadd.f32 %v1153, %v1196
        %v1206 = vadd.f32 %v1154, %v1198
        %s1207 = sld [smem:[#allocation7 + $0x38]]
        %v1208 = vstv %s1207
        %v1209 = vmul.f32 %v1208, %v1105
        %v1210 = vmul.f32 %v1208, %v1106
        %v1211 = vmul.f32 %v1208, %v1107
        %v1212 = vmul.f32 %v1208, %v1108
        %1217 = vrot.lane.b32.xlu0 %v1209, 126
        %v1218 = vpop.permute.xlu0 %1217
        %1219 = vrot.lane.b32.xlu0 %v1210, 126
        %v1220 = vpop.permute.xlu0 %1219
        %1221 = vrot.lane.b32.xlu0 %v1211, 126
        %v1222 = vpop.permute.xlu0 %1221
        %1223 = vrot.lane.b32.xlu0 %v1212, 126
        %v1224 = vpop.permute.xlu0 %1223
        %v1229 = vadd.f32 %v1177, %v1218
        %v1230 = vadd.f32 %v1178, %v1220
        %v1231 = vadd.f32 %v1179, %v1222
        %v1232 = vadd.f32 %v1180, %v1224
        %v1233 = vld [vmem:[%s1104 + $0x1] sm:$0xff]
        %v1234 = vld [vmem:[%s1104 + $0x9] sm:$0xff]
        %v1235 = vld [vmem:[%s1104 + $0x11] sm:$0xff]
        %v1236 = vld [vmem:[%s1104 + $0x19] sm:$0xff]
        %s1237 = sld [smem:[#allocation7 + $0x15]]
        %v1238 = vstv %s1237
        %v1239 = vmul.f32 %v1238, %v1233
        %v1240 = vmul.f32 %v1238, %v1234
        %v1241 = vmul.f32 %v1238, %v1235
        %v1242 = vmul.f32 %v1238, %v1236
        %v1243 = vadd.f32 %v1203, %v1239
        %v1244 = vadd.f32 %v1204, %v1240
        %v1245 = vadd.f32 %v1205, %v1241
        %v1246 = vadd.f32 %v1206, %v1242
        %s1247 = sld [smem:[#allocation7 + $0x39]]
        %v1248 = vstv %s1247
        %v1249 = vmul.f32 %v1248, %v1233
        %v1250 = vmul.f32 %v1248, %v1234
        %v1251 = vmul.f32 %v1248, %v1235
        %v1252 = vmul.f32 %v1248, %v1236
        %v1253 = vadd.f32 %v1229, %v1249
        %v1254 = vadd.f32 %v1230, %v1250
        %v1255 = vadd.f32 %v1231, %v1251
        %v1256 = vadd.f32 %v1232, %v1252
        %s1257 = sld [smem:[#allocation7 + $0x16]]
        %v1258 = vstv %s1257
        %v1259 = vmul.f32 %v1258, %v1233
        %v1260 = vmul.f32 %v1258, %v1234
        %v1261 = vmul.f32 %v1258, %v1235
        %v1262 = vmul.f32 %v1258, %v1236
        %1267 = vrot.lane.b32.xlu0 %v1259, 127
        %v1268 = vpop.permute.xlu0 %1267
        %1269 = vrot.lane.b32.xlu0 %v1260, 127
        %v1270 = vpop.permute.xlu0 %1269
        %1271 = vrot.lane.b32.xlu0 %v1261, 127
        %v1272 = vpop.permute.xlu0 %1271
        %1273 = vrot.lane.b32.xlu0 %v1262, 127
        %v1274 = vpop.permute.xlu0 %1273
        %v1279 = vadd.f32 %v1243, %v1268
        %v1280 = vadd.f32 %v1244, %v1270
        %v1281 = vadd.f32 %v1245, %v1272
        %v1282 = vadd.f32 %v1246, %v1274
        %s1283 = sld [smem:[#allocation7 + $0x3a]]
        %v1284 = vstv %s1283
        %v1285 = vmul.f32 %v1284, %v1233
        %v1286 = vmul.f32 %v1284, %v1234
        %v1287 = vmul.f32 %v1284, %v1235
        %v1288 = vmul.f32 %v1284, %v1236
        %1293 = vrot.lane.b32.xlu0 %v1285, 127
        %v1294 = vpop.permute.xlu0 %1293
        %1295 = vrot.lane.b32.xlu0 %v1286, 127
        %v1296 = vpop.permute.xlu0 %1295
        %1297 = vrot.lane.b32.xlu0 %v1287, 127
        %v1298 = vpop.permute.xlu0 %1297
        %1299 = vrot.lane.b32.xlu0 %v1288, 127
        %v1300 = vpop.permute.xlu0 %1299
        %v1305 = vadd.f32 %v1253, %v1294
        %v1306 = vadd.f32 %v1254, %v1296
        %v1307 = vadd.f32 %v1255, %v1298
        %v1308 = vadd.f32 %v1256, %v1300
        %s1309 = sld [smem:[#allocation7 + $0x17]]
        %v1310 = vstv %s1309
        %v1311 = vmul.f32 %v1310, %v1233
        %v1312 = vmul.f32 %v1310, %v1234
        %v1313 = vmul.f32 %v1310, %v1235
        %v1314 = vmul.f32 %v1310, %v1236
        %1319 = vrot.lane.b32.xlu0 %v1311, 126
        %v1320 = vpop.permute.xlu0 %1319
        %1321 = vrot.lane.b32.xlu0 %v1312, 126
        %v1322 = vpop.permute.xlu0 %1321
        %1323 = vrot.lane.b32.xlu0 %v1313, 126
        %v1324 = vpop.permute.xlu0 %1323
        %1325 = vrot.lane.b32.xlu0 %v1314, 126
        %v1326 = vpop.permute.xlu0 %1325
        %v1331 = vadd.f32 %v1279, %v1320
        %v1332 = vadd.f32 %v1280, %v1322
        %v1333 = vadd.f32 %v1281, %v1324
        %v1334 = vadd.f32 %v1282, %v1326
        %s1335 = sld [smem:[#allocation7 + $0x3b]]
        %v1336 = vstv %s1335
        %v1337 = vmul.f32 %v1336, %v1233
        %v1338 = vmul.f32 %v1336, %v1234
        %v1339 = vmul.f32 %v1336, %v1235
        %v1340 = vmul.f32 %v1336, %v1236
        %1345 = vrot.lane.b32.xlu0 %v1337, 126
        %v1346 = vpop.permute.xlu0 %1345
        %1347 = vrot.lane.b32.xlu0 %v1338, 126
        %v1348 = vpop.permute.xlu0 %1347
        %1349 = vrot.lane.b32.xlu0 %v1339, 126
        %v1350 = vpop.permute.xlu0 %1349
        %1351 = vrot.lane.b32.xlu0 %v1340, 126
        %v1352 = vpop.permute.xlu0 %1351
        %v1357 = vadd.f32 %v1305, %v1346
        %v1358 = vadd.f32 %v1306, %v1348
        %v1359 = vadd.f32 %v1307, %v1350
        %v1360 = vadd.f32 %v1308, %v1352
        %v1361 = vld [vmem:[%s1104 + $0x2] sm:$0xff]
        %v1362 = vld [vmem:[%s1104 + $0xa] sm:$0xff]
        %v1363 = vld [vmem:[%s1104 + $0x12] sm:$0xff]
        %v1364 = vld [vmem:[%s1104 + $0x1a] sm:$0xff]
        %s1365 = sld [smem:[#allocation7 + $0x18]]
        %v1366 = vstv %s1365
        %v1367 = vmul.f32 %v1366, %v1361
        %v1368 = vmul.f32 %v1366, %v1362
        %v1369 = vmul.f32 %v1366, %v1363
        %v1370 = vmul.f32 %v1366, %v1364
        %v1371 = vadd.f32 %v1331, %v1367
        %v1372 = vadd.f32 %v1332, %v1368
        %v1373 = vadd.f32 %v1333, %v1369
        %v1374 = vadd.f32 %v1334, %v1370
        %s1375 = sld [smem:[#allocation7 + $0x3c]]
        %v1376 = vstv %s1375
        %v1377 = vmul.f32 %v1376, %v1361
        %v1378 = vmul.f32 %v1376, %v1362
        %v1379 = vmul.f32 %v1376, %v1363
        %v1380 = vmul.f32 %v1376, %v1364
        %v1381 = vadd.f32 %v1357, %v1377
        %v1382 = vadd.f32 %v1358, %v1378
        %v1383 = vadd.f32 %v1359, %v1379
        %v1384 = vadd.f32 %v1360, %v1380
        %s1385 = sld [smem:[#allocation7 + $0x19]]
        %v1386 = vstv %s1385
        %v1387 = vmul.f32 %v1386, %v1361
        %v1388 = vmul.f32 %v1386, %v1362
        %v1389 = vmul.f32 %v1386, %v1363
        %v1390 = vmul.f32 %v1386, %v1364
        %1395 = vrot.lane.b32.xlu0 %v1387, 127
        %v1396 = vpop.permute.xlu0 %1395
        %1397 = vrot.lane.b32.xlu0 %v1388, 127
        %v1398 = vpop.permute.xlu0 %1397
        %1399 = vrot.lane.b32.xlu0 %v1389, 127
        %v1400 = vpop.permute.xlu0 %1399
        %1401 = vrot.lane.b32.xlu0 %v1390, 127
        %v1402 = vpop.permute.xlu0 %1401
        %v1407 = vadd.f32 %v1371, %v1396
        %v1408 = vadd.f32 %v1372, %v1398
        %v1409 = vadd.f32 %v1373, %v1400
        %v1410 = vadd.f32 %v1374, %v1402
        %s1411 = sld [smem:[#allocation7 + $0x3d]]
        %v1412 = vstv %s1411
        %v1413 = vmul.f32 %v1412, %v1361
        %v1414 = vmul.f32 %v1412, %v1362
        %v1415 = vmul.f32 %v1412, %v1363
        %v1416 = vmul.f32 %v1412, %v1364
        %1421 = vrot.lane.b32.xlu0 %v1413, 127
        %v1422 = vpop.permute.xlu0 %1421
        %1423 = vrot.lane.b32.xlu0 %v1414, 127
        %v1424 = vpop.permute.xlu0 %1423
        %1425 = vrot.lane.b32.xlu0 %v1415, 127
        %v1426 = vpop.permute.xlu0 %1425
        %1427 = vrot.lane.b32.xlu0 %v1416, 127
        %v1428 = vpop.permute.xlu0 %1427
        %v1433 = vadd.f32 %v1381, %v1422
        %v1434 = vadd.f32 %v1382, %v1424
        %v1435 = vadd.f32 %v1383, %v1426
        %v1436 = vadd.f32 %v1384, %v1428
        %s1437 = sld [smem:[#allocation7 + $0x1a]]
        %v1438 = vstv %s1437
        %v1439 = vmul.f32 %v1438, %v1361
        %v1440 = vmul.f32 %v1438, %v1362
        %v1441 = vmul.f32 %v1438, %v1363
        %v1442 = vmul.f32 %v1438, %v1364
        %1447 = vrot.lane.b32.xlu0 %v1439, 126
        %v1448 = vpop.permute.xlu0 %1447
        %1449 = vrot.lane.b32.xlu0 %v1440, 126
        %v1450 = vpop.permute.xlu0 %1449
        %1451 = vrot.lane.b32.xlu0 %v1441, 126
        %v1452 = vpop.permute.xlu0 %1451
        %1453 = vrot.lane.b32.xlu0 %v1442, 126
        %v1454 = vpop.permute.xlu0 %1453
        %v1459 = vadd.f32 %v1407, %v1448
        %v1460 = vadd.f32 %v1408, %v1450
        %v1461 = vadd.f32 %v1409, %v1452
        %v1462 = vadd.f32 %v1410, %v1454
        %s1463 = sld [smem:[#allocation7 + $0x3e]]
        %v1464 = vstv %s1463
        %v1465 = vmul.f32 %v1464, %v1361
        %v1466 = vmul.f32 %v1464, %v1362
        %v1467 = vmul.f32 %v1464, %v1363
        %v1468 = vmul.f32 %v1464, %v1364
        %1473 = vrot.lane.b32.xlu0 %v1465, 126
        %v1474 = vpop.permute.xlu0 %1473
        %1475 = vrot.lane.b32.xlu0 %v1466, 126
        %v1476 = vpop.permute.xlu0 %1475
        %1477 = vrot.lane.b32.xlu0 %v1467, 126
        %v1478 = vpop.permute.xlu0 %1477
        %1479 = vrot.lane.b32.xlu0 %v1468, 126
        %v1480 = vpop.permute.xlu0 %1479
        %v1485 = vadd.f32 %v1433, %v1474
        %v1486 = vadd.f32 %v1434, %v1476
        %v1487 = vadd.f32 %v1435, %v1478
        %v1488 = vadd.f32 %v1436, %v1480
        %s1489 = scalar_lea.vmem [#allocation2], 120
        %v1490 = vld [vmem:[%s1489] sm:$0xff]
        %v1491 = vld [vmem:[%s1489 + $0x8] sm:$0xff]
        %v1492 = vld [vmem:[%s1489 + $0x10] sm:$0xff]
        %v1493 = vld [vmem:[%s1489 + $0x18] sm:$0xff]
        %s1494 = sld [smem:[#allocation7 + $0x1b]]
        %v1495 = vstv %s1494
        %v1496 = vmul.f32 %v1495, %v1490
        %v1497 = vmul.f32 %v1495, %v1491
        %v1498 = vmul.f32 %v1495, %v1492
        %v1499 = vmul.f32 %v1495, %v1493
        %v1500 = vadd.f32 %v1459, %v1496
        %v1501 = vadd.f32 %v1460, %v1497
        %v1502 = vadd.f32 %v1461, %v1498
        %v1503 = vadd.f32 %v1462, %v1499
        %s1504 = sld [smem:[#allocation7 + $0x3f]]
        %v1505 = vstv %s1504
        %v1506 = vmul.f32 %v1505, %v1490
        %v1507 = vmul.f32 %v1505, %v1491
        %v1508 = vmul.f32 %v1505, %v1492
        %v1509 = vmul.f32 %v1505, %v1493
        %v1510 = vadd.f32 %v1485, %v1506
        %v1511 = vadd.f32 %v1486, %v1507
        %v1512 = vadd.f32 %v1487, %v1508
        %v1513 = vadd.f32 %v1488, %v1509
        %s1514 = sld [smem:[#allocation7 + $0x1c]]
        %v1515 = vstv %s1514
        %v1516 = vmul.f32 %v1515, %v1490
        %v1517 = vmul.f32 %v1515, %v1491
        %v1518 = vmul.f32 %v1515, %v1492
        %v1519 = vmul.f32 %v1515, %v1493
        %1524 = vrot.lane.b32.xlu0 %v1516, 127
        %v1525 = vpop.permute.xlu0 %1524
        %1526 = vrot.lane.b32.xlu0 %v1517, 127
        %v1527 = vpop.permute.xlu0 %1526
        %1528 = vrot.lane.b32.xlu0 %v1518, 127
        %v1529 = vpop.permute.xlu0 %1528
        %1530 = vrot.lane.b32.xlu0 %v1519, 127
        %v1531 = vpop.permute.xlu0 %1530
        %v1536 = vadd.f32 %v1500, %v1525
        %v1537 = vadd.f32 %v1501, %v1527
        %v1538 = vadd.f32 %v1502, %v1529
        %v1539 = vadd.f32 %v1503, %v1531
        %s1540 = sld [smem:[#allocation7 + $0x40]]
        %v1541 = vstv %s1540
        %v1542 = vmul.f32 %v1541, %v1490
        %v1543 = vmul.f32 %v1541, %v1491
        %v1544 = vmul.f32 %v1541, %v1492
        %v1545 = vmul.f32 %v1541, %v1493
        %1550 = vrot.lane.b32.xlu0 %v1542, 127
        %v1551 = vpop.permute.xlu0 %1550
        %1552 = vrot.lane.b32.xlu0 %v1543, 127
        %v1553 = vpop.permute.xlu0 %1552
        %1554 = vrot.lane.b32.xlu0 %v1544, 127
        %v1555 = vpop.permute.xlu0 %1554
        %1556 = vrot.lane.b32.xlu0 %v1545, 127
        %v1557 = vpop.permute.xlu0 %1556
        %v1562 = vadd.f32 %v1510, %v1551
        %v1563 = vadd.f32 %v1511, %v1553
        %v1564 = vadd.f32 %v1512, %v1555
        %v1565 = vadd.f32 %v1513, %v1557
        %s1566 = sld [smem:[#allocation7 + $0x1d]]
        %v1567 = vstv %s1566
        %v1568 = vmul.f32 %v1567, %v1490
        %v1569 = vmul.f32 %v1567, %v1491
        %v1570 = vmul.f32 %v1567, %v1492
        %v1571 = vmul.f32 %v1567, %v1493
        %1576 = vrot.lane.b32.xlu0 %v1568, 126
        %v1577 = vpop.permute.xlu0 %1576
        %1578 = vrot.lane.b32.xlu0 %v1569, 126
        %v1579 = vpop.permute.xlu0 %1578
        %1580 = vrot.lane.b32.xlu0 %v1570, 126
        %v1581 = vpop.permute.xlu0 %1580
        %1582 = vrot.lane.b32.xlu0 %v1571, 126
        %v1583 = vpop.permute.xlu0 %1582
        %v1588 = vadd.f32 %v1536, %v1577
        %v1589 = vadd.f32 %v1537, %v1579
        %v1590 = vadd.f32 %v1538, %v1581
        %v1591 = vadd.f32 %v1539, %v1583
        %s1592 = sld [smem:[#allocation7 + $0x41]]
        %v1593 = vstv %s1592
        %v1594 = vmul.f32 %v1593, %v1490
        %v1595 = vmul.f32 %v1593, %v1491
        %v1596 = vmul.f32 %v1593, %v1492
        %v1597 = vmul.f32 %v1593, %v1493
        %1602 = vrot.lane.b32.xlu0 %v1594, 126
        %v1603 = vpop.permute.xlu0 %1602
        %1604 = vrot.lane.b32.xlu0 %v1595, 126
        %v1605 = vpop.permute.xlu0 %1604
        %1606 = vrot.lane.b32.xlu0 %v1596, 126
        %v1607 = vpop.permute.xlu0 %1606
        %1608 = vrot.lane.b32.xlu0 %v1597, 126
        %v1609 = vpop.permute.xlu0 %1608
        %v1614 = vadd.f32 %v1562, %v1603
        %v1615 = vadd.f32 %v1563, %v1605
        %v1616 = vadd.f32 %v1564, %v1607
        %v1617 = vadd.f32 %v1565, %v1609
        %v1618 = vld [vmem:[%s1489 + $0x1] sm:$0xff]
        %v1619 = vld [vmem:[%s1489 + $0x9] sm:$0xff]
        %v1620 = vld [vmem:[%s1489 + $0x11] sm:$0xff]
        %v1621 = vld [vmem:[%s1489 + $0x19] sm:$0xff]
        %s1622 = sld [smem:[#allocation7 + $0x1e]]
        %v1623 = vstv %s1622
        %v1624 = vmul.f32 %v1623, %v1618
        %v1625 = vmul.f32 %v1623, %v1619
        %v1626 = vmul.f32 %v1623, %v1620
        %v1627 = vmul.f32 %v1623, %v1621
        %v1628 = vadd.f32 %v1588, %v1624
        %v1629 = vadd.f32 %v1589, %v1625
        %v1630 = vadd.f32 %v1590, %v1626
        %v1631 = vadd.f32 %v1591, %v1627
        %s1632 = sld [smem:[#allocation7 + $0x42]]
        %v1633 = vstv %s1632
        %v1634 = vmul.f32 %v1633, %v1618
        %v1635 = vmul.f32 %v1633, %v1619
        %v1636 = vmul.f32 %v1633, %v1620
        %v1637 = vmul.f32 %v1633, %v1621
        %v1638 = vadd.f32 %v1614, %v1634
        %v1639 = vadd.f32 %v1615, %v1635
        %v1640 = vadd.f32 %v1616, %v1636
        %v1641 = vadd.f32 %v1617, %v1637
        %s1642 = sld [smem:[#allocation7 + $0x1f]]
        %v1643 = vstv %s1642
        %v1644 = vmul.f32 %v1643, %v1618
        %v1645 = vmul.f32 %v1643, %v1619
        %v1646 = vmul.f32 %v1643, %v1620
        %v1647 = vmul.f32 %v1643, %v1621
        %1652 = vrot.lane.b32.xlu0 %v1644, 127
        %v1653 = vpop.permute.xlu0 %1652
        %1654 = vrot.lane.b32.xlu0 %v1645, 127
        %v1655 = vpop.permute.xlu0 %1654
        %1656 = vrot.lane.b32.xlu0 %v1646, 127
        %v1657 = vpop.permute.xlu0 %1656
        %1658 = vrot.lane.b32.xlu0 %v1647, 127
        %v1659 = vpop.permute.xlu0 %1658
        %v1664 = vadd.f32 %v1628, %v1653
        %v1665 = vadd.f32 %v1629, %v1655
        %v1666 = vadd.f32 %v1630, %v1657
        %v1667 = vadd.f32 %v1631, %v1659
        %s1668 = sld [smem:[#allocation7 + $0x43]]
        %v1669 = vstv %s1668
        %v1670 = vmul.f32 %v1669, %v1618
        %v1671 = vmul.f32 %v1669, %v1619
        %v1672 = vmul.f32 %v1669, %v1620
        %v1673 = vmul.f32 %v1669, %v1621
        %1678 = vrot.lane.b32.xlu0 %v1670, 127
        %v1679 = vpop.permute.xlu0 %1678
        %1680 = vrot.lane.b32.xlu0 %v1671, 127
        %v1681 = vpop.permute.xlu0 %1680
        %1682 = vrot.lane.b32.xlu0 %v1672, 127
        %v1683 = vpop.permute.xlu0 %1682
        %1684 = vrot.lane.b32.xlu0 %v1673, 127
        %v1685 = vpop.permute.xlu0 %1684
        %v1690 = vadd.f32 %v1638, %v1679
        %v1691 = vadd.f32 %v1639, %v1681
        %v1692 = vadd.f32 %v1640, %v1683
        %v1693 = vadd.f32 %v1641, %v1685
        %s1694 = sld [smem:[#allocation7 + $0x20]]
        %v1695 = vstv %s1694
        %v1696 = vmul.f32 %v1695, %v1618
        %v1697 = vmul.f32 %v1695, %v1619
        %v1698 = vmul.f32 %v1695, %v1620
        %v1699 = vmul.f32 %v1695, %v1621
        %1704 = vrot.lane.b32.xlu0 %v1696, 126
        %v1705 = vpop.permute.xlu0 %1704
        %1706 = vrot.lane.b32.xlu0 %v1697, 126
        %v1707 = vpop.permute.xlu0 %1706
        %1708 = vrot.lane.b32.xlu0 %v1698, 126
        %v1709 = vpop.permute.xlu0 %1708
        %1710 = vrot.lane.b32.xlu0 %v1699, 126
        %v1711 = vpop.permute.xlu0 %1710
        %v1716 = vadd.f32 %v1664, %v1705
        %v1717 = vadd.f32 %v1665, %v1707
        %v1718 = vadd.f32 %v1666, %v1709
        %v1719 = vadd.f32 %v1667, %v1711
        %s1720 = sld [smem:[#allocation7 + $0x44]]
        %v1721 = vstv %s1720
        %v1722 = vmul.f32 %v1721, %v1618
        %v1723 = vmul.f32 %v1721, %v1619
        %v1724 = vmul.f32 %v1721, %v1620
        %v1725 = vmul.f32 %v1721, %v1621
        %1730 = vrot.lane.b32.xlu0 %v1722, 126
        %v1731 = vpop.permute.xlu0 %1730
        %1732 = vrot.lane.b32.xlu0 %v1723, 126
        %v1733 = vpop.permute.xlu0 %1732
        %1734 = vrot.lane.b32.xlu0 %v1724, 126
        %v1735 = vpop.permute.xlu0 %1734
        %1736 = vrot.lane.b32.xlu0 %v1725, 126
        %v1737 = vpop.permute.xlu0 %1736
        %v1742 = vadd.f32 %v1690, %v1731
        %v1743 = vadd.f32 %v1691, %v1733
        %v1744 = vadd.f32 %v1692, %v1735
        %v1745 = vadd.f32 %v1693, %v1737
        %v1746 = vld [vmem:[%s1489 + $0x2] sm:$0xff]
        %v1747 = vld [vmem:[%s1489 + $0xa] sm:$0xff]
        %v1748 = vld [vmem:[%s1489 + $0x12] sm:$0xff]
        %v1749 = vld [vmem:[%s1489 + $0x1a] sm:$0xff]
        %s1750 = sld [smem:[#allocation7 + $0x21]]
        %v1751 = vstv %s1750
        %v1752 = vmul.f32 %v1751, %v1746
        %v1753 = vmul.f32 %v1751, %v1747
        %v1754 = vmul.f32 %v1751, %v1748
        %v1755 = vmul.f32 %v1751, %v1749
        %v1756 = vadd.f32 %v1716, %v1752
        %v1757 = vadd.f32 %v1717, %v1753
        %v1758 = vadd.f32 %v1718, %v1754
        %v1759 = vadd.f32 %v1719, %v1755
        %s1760 = sld [smem:[#allocation7 + $0x45]]
        %v1761 = vstv %s1760
        %v1762 = vmul.f32 %v1761, %v1746
        %v1763 = vmul.f32 %v1761, %v1747
        %v1764 = vmul.f32 %v1761, %v1748
        %v1765 = vmul.f32 %v1761, %v1749
        %v1766 = vadd.f32 %v1742, %v1762
        %v1767 = vadd.f32 %v1743, %v1763
        %v1768 = vadd.f32 %v1744, %v1764
        %v1769 = vadd.f32 %v1745, %v1765
        %s1770 = sld [smem:[#allocation7 + $0x22]]
        %v1771 = vstv %s1770
        %v1772 = vmul.f32 %v1771, %v1746
        %v1773 = vmul.f32 %v1771, %v1747
        %v1774 = vmul.f32 %v1771, %v1748
        %v1775 = vmul.f32 %v1771, %v1749
        %1780 = vrot.lane.b32.xlu0 %v1772, 127
        %v1781 = vpop.permute.xlu0 %1780
        %1782 = vrot.lane.b32.xlu0 %v1773, 127
        %v1783 = vpop.permute.xlu0 %1782
        %1784 = vrot.lane.b32.xlu0 %v1774, 127
        %v1785 = vpop.permute.xlu0 %1784
        %1786 = vrot.lane.b32.xlu0 %v1775, 127
        %v1787 = vpop.permute.xlu0 %1786
        %v1792 = vadd.f32 %v1756, %v1781
        %v1793 = vadd.f32 %v1757, %v1783
        %v1794 = vadd.f32 %v1758, %v1785
        %v1795 = vadd.f32 %v1759, %v1787
        %s1796 = sld [smem:[#allocation7 + $0x46]]
        %v1797 = vstv %s1796
        %v1798 = vmul.f32 %v1797, %v1746
        %v1799 = vmul.f32 %v1797, %v1747
        %v1800 = vmul.f32 %v1797, %v1748
        %v1801 = vmul.f32 %v1797, %v1749
        %1806 = vrot.lane.b32.xlu0 %v1798, 127
        %v1807 = vpop.permute.xlu0 %1806
        %1808 = vrot.lane.b32.xlu0 %v1799, 127
        %v1809 = vpop.permute.xlu0 %1808
        %1810 = vrot.lane.b32.xlu0 %v1800, 127
        %v1811 = vpop.permute.xlu0 %1810
        %1812 = vrot.lane.b32.xlu0 %v1801, 127
        %v1813 = vpop.permute.xlu0 %1812
        %v1818 = vadd.f32 %v1766, %v1807
        %v1819 = vadd.f32 %v1767, %v1809
        %v1820 = vadd.f32 %v1768, %v1811
        %v1821 = vadd.f32 %v1769, %v1813
        %s1822 = sld [smem:[#allocation7 + $0x23]]
        %v1823 = vstv %s1822
        %v1824 = vmul.f32 %v1823, %v1746
        %v1825 = vmul.f32 %v1823, %v1747
        %v1826 = vmul.f32 %v1823, %v1748
        %v1827 = vmul.f32 %v1823, %v1749
        %1832 = vrot.lane.b32.xlu0 %v1824, 126
        %v1833 = vpop.permute.xlu0 %1832
        %1834 = vrot.lane.b32.xlu0 %v1825, 126
        %v1835 = vpop.permute.xlu0 %1834
        %1836 = vrot.lane.b32.xlu0 %v1826, 126
        %v1837 = vpop.permute.xlu0 %1836
        %1838 = vrot.lane.b32.xlu0 %v1827, 126
        %v1839 = vpop.permute.xlu0 %1838
        %v1844 = vadd.f32 %v1792, %v1833
        %v1845 = vadd.f32 %v1793, %v1835
        %v1846 = vadd.f32 %v1794, %v1837
        %v1847 = vadd.f32 %v1795, %v1839
        %s1848 = sld [smem:[#allocation7 + $0x47]]
        %v1849 = vstv %s1848
        %v1850 = vmul.f32 %v1849, %v1746
        %v1851 = vmul.f32 %v1849, %v1747
        %v1852 = vmul.f32 %v1849, %v1748
        %v1853 = vmul.f32 %v1849, %v1749
        %1858 = vrot.lane.b32.xlu0 %v1850, 126
        %v1859 = vpop.permute.xlu0 %1858
        %1860 = vrot.lane.b32.xlu0 %v1851, 126
        %v1861 = vpop.permute.xlu0 %1860
        %1862 = vrot.lane.b32.xlu0 %v1852, 126
        %v1863 = vpop.permute.xlu0 %1862
        %1864 = vrot.lane.b32.xlu0 %v1853, 126
        %v1865 = vpop.permute.xlu0 %1864
        %v1870 = vadd.f32 %v1818, %v1859
        %v1871 = vadd.f32 %v1819, %v1861
        %v1872 = vadd.f32 %v1820, %v1863
        %v1873 = vadd.f32 %v1821, %v1865
        %s1874 = sld [smem:[#allocation8]]
        %v1875 = vstv %s1874
        %v1876 = vadd.f32 %v1844, %v1875
        %v1877 = vadd.f32 %v1845, %v1875
        %v1878 = vadd.f32 %v1846, %v1875
        %v1879 = vadd.f32 %v1847, %v1875
        %v1880 = vmin.f32 %v1876, 0.0
        %v1881 = vmin.f32 %v1877, 0.0
        %v1882 = vmin.f32 %v1878, 0.0
        %v1883 = vmin.f32 %v1879, 0.0
        %v1884 = vmul.f32 %v1880, 1.442695
        %v1885 = vpow.pop %v1884
        %v1886 = vmul.f32 %v1881, 1.442695
        %v1887 = vpow.pop %v1886
        %v1888 = vmul.f32 %v1882, 1.442695
        %v1889 = vpow.pop %v1888
        %v1890 = vmul.f32 %v1883, 1.442695
        %v1891 = vpow.pop %v1890
        %v1892 = vsub.f32 %v1885, 1.0
        %v1893 = vsub.f32 %v1887, 1.0
        %v1894 = vsub.f32 %v1889, 1.0
        %v1895 = vsub.f32 %v1891, 1.0
        %v1896 = vmul.f32 %v1892, 1.6732632
        %v1897 = vmul.f32 %v1893, 1.6732632
        %v1898 = vmul.f32 %v1894, 1.6732632
        %v1899 = vmul.f32 %v1895, 1.6732632
        %vm1900 = vcmp.gt.f32.partialorder %v1876, 0.0
        %vm1901 = vcmp.gt.f32.partialorder %v1877, 0.0
        %vm1902 = vcmp.gt.f32.partialorder %v1878, 0.0
        %vm1903 = vcmp.gt.f32.partialorder %v1879, 0.0
        %v1904 = vsel %vm1900, %v1876, %v1896
        %v1905 = vsel %vm1901, %v1877, %v1897
        %v1906 = vsel %vm1902, %v1878, %v1898
        %v1907 = vsel %vm1903, %v1879, %v1899
        %v1908 = vmul.f32 %v1904, 1.050701
        %v1909 = vmul.f32 %v1905, 1.050701
        %v1910 = vmul.f32 %v1906, 1.050701
        %v1911 = vmul.f32 %v1907, 1.050701
        %v1912 = vsub.f32 0.0, %v1908
        %v1913 = vsub.f32 0.0, %v1909
        %v1914 = vsub.f32 0.0, %v1910
        %v1915 = vsub.f32 0.0, %v1911
        %v1916 = vmul.f32 %v1912, 1.442695
        %v1917 = vpow.pop %v1916
        %v1918 = vmul.f32 %v1913, 1.442695
        %v1919 = vpow.pop %v1918
        %v1920 = vmul.f32 %v1914, 1.442695
        %v1921 = vpow.pop %v1920
        %v1922 = vmul.f32 %v1915, 1.442695
        %v1923 = vpow.pop %v1922
        %v1924 = vadd.f32 %v1917, 1.0
        %v1925 = vadd.f32 %v1919, 1.0
        %v1926 = vadd.f32 %v1921, 1.0
        %v1927 = vadd.f32 %v1923, 1.0
        %v1928 = vrcp.pop %v1924
        %v1929 = vmul.f32 1.0, %v1928
        %v1930 = vrcp.pop %v1925
        %v1931 = vmul.f32 1.0, %v1930
        %v1932 = vrcp.pop %v1926
        %v1933 = vmul.f32 1.0, %v1932
        %v1934 = vrcp.pop %v1927
        %v1935 = vmul.f32 1.0, %v1934
        %vm1936 = vcmask 261120
        %1937 = vst.msk [vmem:[%s215] sm:$0xff] %vm1936, %v1929
        %1938 = vst.msk [vmem:[%s215 + $0x8] sm:$0xff] %vm1936, %v1931
        %1939 = vst.msk [vmem:[%s215 + $0x10] sm:$0xff] %vm1936, %v1933
        %1940 = vst.msk [vmem:[%s215 + $0x18] sm:$0xff] %vm1936, %v1935
        %s1941 = sld [smem:[#allocation8 + $0x1]]
        %v1942 = vstv %s1941
        %v1943 = vadd.f32 %v1870, %v1942
        %v1944 = vadd.f32 %v1871, %v1942
        %v1945 = vadd.f32 %v1872, %v1942
        %v1946 = vadd.f32 %v1873, %v1942
        %v1947 = vmin.f32 %v1943, 0.0
        %v1948 = vmin.f32 %v1944, 0.0
        %v1949 = vmin.f32 %v1945, 0.0
        %v1950 = vmin.f32 %v1946, 0.0
        %v1951 = vmul.f32 %v1947, 1.442695
        %v1952 = vpow.pop %v1951
        %v1953 = vmul.f32 %v1948, 1.442695
        %v1954 = vpow.pop %v1953
        %v1955 = vmul.f32 %v1949, 1.442695
        %v1956 = vpow.pop %v1955
        %v1957 = vmul.f32 %v1950, 1.442695
        %v1958 = vpow.pop %v1957
        %v1959 = vsub.f32 %v1952, 1.0
        %v1960 = vsub.f32 %v1954, 1.0
        %v1961 = vsub.f32 %v1956, 1.0
        %v1962 = vsub.f32 %v1958, 1.0
        %v1963 = vmul.f32 %v1959, 1.6732632
        %v1964 = vmul.f32 %v1960, 1.6732632
        %v1965 = vmul.f32 %v1961, 1.6732632
        %v1966 = vmul.f32 %v1962, 1.6732632
        %vm1967 = vcmp.gt.f32.partialorder %v1943, 0.0
        %vm1968 = vcmp.gt.f32.partialorder %v1944, 0.0
        %vm1969 = vcmp.gt.f32.partialorder %v1945, 0.0
        %vm1970 = vcmp.gt.f32.partialorder %v1946, 0.0
        %v1971 = vsel %vm1967, %v1943, %v1963
        %v1972 = vsel %vm1968, %v1944, %v1964
        %v1973 = vsel %vm1969, %v1945, %v1965
        %v1974 = vsel %vm1970, %v1946, %v1966
        %v1975 = vmul.f32 %v1971, 1.050701
        %v1976 = vmul.f32 %v1972, 1.050701
        %v1977 = vmul.f32 %v1973, 1.050701
        %v1978 = vmul.f32 %v1974, 1.050701
        %v1979 = vsub.f32 0.0, %v1975
        %v1980 = vsub.f32 0.0, %v1976
        %v1981 = vsub.f32 0.0, %v1977
        %v1982 = vsub.f32 0.0, %v1978
        %v1983 = vmul.f32 %v1979, 1.442695
        %v1984 = vpow.pop %v1983
        %v1985 = vmul.f32 %v1980, 1.442695
        %v1986 = vpow.pop %v1985
        %v1987 = vmul.f32 %v1981, 1.442695
        %v1988 = vpow.pop %v1987
        %v1989 = vmul.f32 %v1982, 1.442695
        %v1990 = vpow.pop %v1989
        %v1991 = vadd.f32 %v1984, 1.0
        %v1992 = vadd.f32 %v1986, 1.0
        %v1993 = vadd.f32 %v1988, 1.0
        %v1994 = vadd.f32 %v1990, 1.0
        %v1995 = vrcp.pop %v1991
        %v1996 = vmul.f32 1.0, %v1995
        %v1997 = vrcp.pop %v1992
        %v1998 = vmul.f32 1.0, %v1997
        %v1999 = vrcp.pop %v1993
        %v2000 = vmul.f32 1.0, %v1999
        %v2001 = vrcp.pop %v1994
        %v2002 = vmul.f32 1.0, %v2001
        %s2003 = scalar_lea.vmem %s215, 32 [#allocation10]
        %2004 = vst.msk [vmem:[%s2003] sm:$0xff] %vm1936, %v1996
        %2005 = vst.msk [vmem:[%s2003 + $0x8] sm:$0xff] %vm1936, %v1998
        %2006 = vst.msk [vmem:[%s2003 + $0x10] sm:$0xff] %vm1936, %v2000
        %2007 = vst.msk [vmem:[%s2003 + $0x18] sm:$0xff] %vm1936, %v2002
        %s2008 = sand.u32 %s98, 1
        %s2009 = scalar_lea.sflag [#allocation5], %s2008
        %s2010 = sand.u32 %s98, 1
        %s2011 = smul.addr %s2010, 64
        %s2012 = scalar_lea.vmem [#allocation10], %s2011
        // Predicated region
        $region45: #{conv_selu_sigmoid.1} parent=31 // pred_check
          %p2013 = pneg %p108
        $region46: #{conv_selu_sigmoid.1} parent=31 // pred_check_branch
          %2015 = sbr.rel (%p2013) target = $region48
        $region47: #{conv_selu_sigmoid.1} parent=31 // pred_region
          %s2017 = ssub.s32 1024, 1024
          %2018 = vsyncadd %s2009, %s2017
          %s2019 = smul.addr %s22, 8
          %s2020 = smul.addr %s2019, 128
          %s2021 = scalar_lea.hbm %s3, %s2020
          %s2022 = sshll.u32 %s2012, 4
          %s2023 = int_to_ptr.vmem [resolvable:$true] %s2022
          %2028 = dma.vmem_to_hbm [thread:$0]  %s2023, 1024, %s2021, %s2009, 128, 128, 8
        $region48: #{conv_selu_sigmoid.1} parent=31 // pred_fallthru
          _
      $region32: #{conv_selu_sigmoid.1} parent=5 // pred_fallthru
        _
      %p2029 = scmp.le.s32.totalorder 2, %s17
      // Predicated region
      $region49: #{conv_selu_sigmoid.1} parent=5 // pred_check
        %p2030 = pneg %p2029
      $region50: #{conv_selu_sigmoid.1} parent=5 // pred_check_branch
        %2032 = sbr.rel (%p2030) target = $region52
      $region51: #{conv_selu_sigmoid.1} parent=5 // pred_region
        %s2033 = ssub.s32 %s17, 2
        // Predicated region
        $region53: #{conv_selu_sigmoid.1} parent=51 // pred_check
          %p2034 = pneg %p114
        $region54: #{conv_selu_sigmoid.1} parent=51 // pred_check_branch
          %2036 = sbr.rel (%p2034) target = $region56
        $region55: #{conv_selu_sigmoid.1} parent=51 // pred_region
          %s2037 = sand.u32 %s99, 1
          %s2038 = scalar_lea.sflag [#allocation5], %s2037
          %s2039 = sand.u32 %s99, 1
          %s2040 = smul.addr %s2039, 64
          %s2041 = scalar_lea.vmem [#allocation10], %s2040
          %2042 = dma.done %s2038, 1024
        $region56: #{conv_selu_sigmoid.1} parent=51 // pred_fallthru
          _
      $region52: #{conv_selu_sigmoid.1} parent=5 // pred_fallthru
        _
    $region6: #{conv_selu_sigmoid.1} parent=1 // loop_footer
      %s21 = sadd.s32 1, %s17
    $region7: #{conv_selu_sigmoid.1} parent=1 // loop_footer_branch
      %16 = sbr.rel target = $region3
    $region8: #{conv_selu_sigmoid.1} parent=1 // loop_exit
      _
    %2043 = vsyncpa [#allocation4], 1
    %s2044 = scalar_lea.sflag [#allocation4], 1
    %2045 = vsyncpa %s2044, 1
    %2046 = vsyncpa [#allocation5], 1
    %s2047 = scalar_lea.sflag [#allocation5], 1
    %2048 = vsyncpa %s2047, 1
    %2049 = vsyncpa [#allocation6], 1
    %s2050 = scalar_lea.sflag [#allocation6], 1
    %2051 = vsyncpa %s2050, 1
    %2052 = vsyncpa [#allocation9], 1

</llo_original>
